<compile_context>
chip_gen: v5e
topology: v5e:2x2
jax: 0.10.0
libtpu: 0.0.40
codegen_flags: <defaults>
</compile_context>

<pallas_src>
import math
from functools import partial

import jax
import jax.numpy as jnp
from jax import lax
from jax.experimental import pallas as pl
from jax.experimental.pallas import tpu as pltpu


# ---------------------------------------------------------------------------
# Fused TransformerBlock kernel (one grid step == one batch element)
# ---------------------------------------------------------------------------
def _transformer_block_kernel(x_ref, bias_ref,
                              wq_ref, wk_ref, wv_ref, wo_ref, bo_ref,
                              g1_ref, be1_ref,
                              w1_ref, b1_ref, w2_ref, b2_ref,
                              g2_ref, be2_ref,
                              out_ref, *, heads):
    x = x_ref[0]          # (L, E)  -- value == key == query for the encoder
    bias = bias_ref[0]    # (L, L)  additive mask bias (0 keep / -1e20 masked)

    L, E = x.shape
    D = E // heads
    inv_scale = 1.0 / math.sqrt(E)   # matches the torch reference (sqrt(embed))

    # ---- Q/K/V projections: one fat (L,E) @ (E,E) matmul each -------------
    q = jnp.dot(x, wq_ref[...], preferred_element_type=jnp.float32)
    k = jnp.dot(x, wk_ref[...], preferred_element_type=jnp.float32)
    v = jnp.dot(x, wv_ref[...], preferred_element_type=jnp.float32)

    wo = wo_ref[...]                                    # (E, E), pre-transposed

    # ---- per-head attention, folded straight into fc_out ------------------
    att = jnp.zeros((L, E), dtype=jnp.float32)
    for h in range(heads):
        lo = h * D
        qh = q[:, lo:lo + D]                            # (L, D) static slices
        kh = k[:, lo:lo + D]
        vh = v[:, lo:lo + D]

        # energy = qh @ kh^T without materializing the transpose
        energy = lax.dot_general(
            qh, kh, (((1,), (1,)), ((), ())),
            preferred_element_type=jnp.float32)          # (L, L)
        energy = (energy + bias) * inv_scale             # mask-before-scale

        m = jnp.max(energy, axis=-1, keepdims=True)
        p = jnp.exp(energy - m)
        denom = jnp.sum(p, axis=-1, keepdims=True)
        attn = p * pl.reciprocal(denom, approx=True)     # EUP, not VALU divide

        ctx = jnp.dot(attn, vh, preferred_element_type=jnp.float32)   # (L, D)
        # fold this head directly through its fc_out rows (no concat)
        att = att + jnp.dot(ctx, wo[lo:lo + D, :],
                            preferred_element_type=jnp.float32)

    att = att + bo_ref[...]                              # (L, E) + (1, E)

    # ---- residual + LayerNorm 1 -------------------------------------------
    eps = 1e-5
    h1 = att + x
    mu1 = jnp.mean(h1, axis=-1, keepdims=True)
    c1 = h1 - mu1
    var1 = jnp.mean(c1 * c1, axis=-1, keepdims=True)
    x1 = c1 * lax.rsqrt(var1 + eps) * g1_ref[...] + be1_ref[...]

    # ---- feed-forward ------------------------------------------------------
    ffh = jnp.dot(x1, w1_ref[...], preferred_element_type=jnp.float32) + b1_ref[...]
    ffh = jnp.maximum(ffh, 0.0)
    ff = jnp.dot(ffh, w2_ref[...], preferred_element_type=jnp.float32) + b2_ref[...]

    # ---- residual + LayerNorm 2 -------------------------------------------
    h2 = ff + x1
    mu2 = jnp.mean(h2, axis=-1, keepdims=True)
    c2 = h2 - mu2
    var2 = jnp.mean(c2 * c2, axis=-1, keepdims=True)
    out = c2 * lax.rsqrt(var2 + eps) * g2_ref[...] + be2_ref[...]

    out_ref[0] = out.astype(out_ref.dtype)


def transformer_block_pallas(x, mask_bias, lp, heads):
    N, L, E = x.shape
    FE = lp["w1_t"].shape[1]

    grid_spec = pltpu.PrefetchScalarGridSpec(
        num_scalar_prefetch=0,
        grid=(N,),
        in_specs=[
            pl.BlockSpec((1, L, E), lambda n: (n, 0, 0)),    # x
            pl.BlockSpec((1, L, L), lambda n: (n, 0, 0)),    # additive mask bias
            pl.BlockSpec((E, E), lambda n: (0, 0)),          # Wq (block-diag, pre-T)
            pl.BlockSpec((E, E), lambda n: (0, 0)),          # Wk
            pl.BlockSpec((E, E), lambda n: (0, 0)),          # Wv
            pl.BlockSpec((E, E), lambda n: (0, 0)),          # Wo (pre-T)
            pl.BlockSpec((1, E), lambda n: (0, 0)),          # bo
            pl.BlockSpec((1, E), lambda n: (0, 0)),          # LN1 gamma
            pl.BlockSpec((1, E), lambda n: (0, 0)),          # LN1 beta
            pl.BlockSpec((E, FE), lambda n: (0, 0)),         # W1 (pre-T)
            pl.BlockSpec((1, FE), lambda n: (0, 0)),         # b1
            pl.BlockSpec((FE, E), lambda n: (0, 0)),         # W2 (pre-T)
            pl.BlockSpec((1, E), lambda n: (0, 0)),          # b2
            pl.BlockSpec((1, E), lambda n: (0, 0)),          # LN2 gamma
            pl.BlockSpec((1, E), lambda n: (0, 0)),          # LN2 beta
        ],
        out_specs=pl.BlockSpec((1, L, E), lambda n: (n, 0, 0)),
    )

    return pl.pallas_call(
        partial(_transformer_block_kernel, heads=heads),
        out_shape=jax.ShapeDtypeStruct((N, L, E), jnp.float32),
        grid_spec=grid_spec,
        compiler_params=pltpu.CompilerParams(
            dimension_semantics=("parallel",),
            vmem_limit_bytes=32 * 1024 * 1024,   # safe on v5e/v6e/v7x
        ),
    )(x, mask_bias,
      lp["wq_bd"], lp["wk_bd"], lp["wv_bd"], lp["wo_t"], lp["bo2"],
      lp["g1"], lp["be1"],
      lp["w1_t"], lp["b1_2"], lp["w2_t"], lp["b2_2"],
      lp["g2"], lp["be2"])


# ---------------------------------------------------------------------------
# Wrapper-side parameter preparation (one-time XLA ops, outside the kernel)
# ---------------------------------------------------------------------------
def prepare_layer_params(raw, heads):
    E = raw["wo"].shape[0]
    eye = jnp.eye(heads, dtype=jnp.float32)
    return {
        # block-diagonal, already transposed: proj = x @ W  (torch y = x @ W.T)
        "wq_bd": jnp.kron(eye, raw["wq"].T),
        "wk_bd": jnp.kron(eye, raw["wk"].T),
        "wv_bd": jnp.kron(eye, raw["wv"].T),
        "wo_t": raw["wo"].T,
        "bo2": raw["bo"].reshape(1, E),
        "g1": raw["g1"].reshape(1, E),
        "be1": raw["be1"].reshape(1, E),
        "w1_t": raw["w1"].T,
        "b1_2": raw["b1"].reshape(1, -1),
        "w2_t": raw["w2"].T,
        "b2_2": raw["b2"].reshape(1, E),
        "g2": raw["g2"].reshape(1, E),
        "be2": raw["be2"].reshape(1, E),
    }


def encoder_pallas(x, mask, layer_params, heads):
    # mask -> additive bias, computed ONCE for all layers/heads (f32 path only)
    mask_bias = jnp.where(mask == 0.0, jnp.float32(-1e20), jnp.float32(0.0))
    out = x  # dropout == identity at inference
    for lp in layer_params:
        out = transformer_block_pallas(out, mask_bias, lp, heads)
    return out


# ---------------------------------------------------------------------------
# Pure-JAX reference mirroring the torch forward (eval mode)
# ---------------------------------------------------------------------------
def _layernorm_ref(x, gamma, beta, eps=1e-5):
    mu = jnp.mean(x, axis=-1, keepdims=True)
    var = jnp.mean((x - mu) ** 2, axis=-1, keepdims=True)
    return (x - mu) / jnp.sqrt(var + eps) * gamma + beta


def transformer_block_ref(x, mask, raw, heads):
    N, L, E = x.shape
    D = E // heads
    xs = x.reshape(N, L, heads, D)
    v = xs @ raw["wv"].T
    k = xs @ raw["wk"].T
    q = xs @ raw["wq"].T
    energy = jnp.einsum("nqhd,nkhd->nhqk", q, k)
    energy = jnp.where(mask[:, None, :, :] == 0.0, jnp.float32(-1e20), energy)
    attn = jax.nn.softmax(energy / math.sqrt(E), axis=3)
    att = jnp.einsum("nhqk,nkhd->nqhd", attn, v).reshape(N, L, E)
    att = att @ raw["wo"].T + raw["bo"]
    x1 = _layernorm_ref(att + x, raw["g1"], raw["be1"])
    ff = jnp.maximum(x1 @ raw["w1"].T + raw["b1"], 0.0) @ raw["w2"].T + raw["b2"]
    return _layernorm_ref(ff + x1, raw["g2"], raw["be2"])


def encoder_ref(x, mask, raw_layers, heads):
    out = x
    for raw in raw_layers:
        out = transformer_block_ref(out, mask, raw, heads)
    return out


# ---------------------------------------------------------------------------
if __name__ == "__main__":
    N, L, E, H = 2, 8, 32, 4          # batch, seq, embed_size, heads
    num_layers, f_exp = 2, 4
    D = E // H
    FE = f_exp * E

    key = jax.random.PRNGKey(0)
    kx, kp = jax.random.split(key)

    x = jax.random.normal(kx, (N, L, E), dtype=jnp.float32)
    # causal mask shared across batch (0 -> masked)
    mask = jnp.broadcast_to(
        jnp.tril(jnp.ones((L, L), dtype=jnp.float32))[None], (N, L, L))

    raw_layers = []
    for li in range(num_layers):
        ks = jax.random.split(jax.random.fold_in(kp, li), 13)
        raw_layers.append(dict(
            wq=0.2 * jax.random.normal(ks[0], (D, D), jnp.float32),
            wk=0.2 * jax.random.normal(ks[1], (D, D), jnp.float32),
            wv=0.2 * jax.random.normal(ks[2], (D, D), jnp.float32),
            wo=0.1 * jax.random.normal(ks[3], (E, E), jnp.float32),
            bo=0.05 * jax.random.normal(ks[4], (E,), jnp.float32),
            g1=1.0 + 0.1 * jax.random.normal(ks[5], (E,), jnp.float32),
            be1=0.05 * jax.random.normal(ks[6], (E,), jnp.float32),
            w1=0.1 * jax.random.normal(ks[7], (FE, E), jnp.float32),
            b1=0.05 * jax.random.normal(ks[8], (FE,), jnp.float32),
            w2=0.1 * jax.random.normal(ks[9], (E, FE), jnp.float32),
            b2=0.05 * jax.random.normal(ks[10], (E,), jnp.float32),
            g2=1.0 + 0.1 * jax.random.normal(ks[11], (E,), jnp.float32),
            be2=0.05 * jax.random.normal(ks[12], (E,), jnp.float32),
        ))

    layer_params = [prepare_layer_params(raw, H) for raw in raw_layers]

    out = encoder_pallas(x, mask, layer_params, H)
    out = jax.block_until_ready(out)

    ref = encoder_ref(x, mask, raw_layers, H)
    assert out.shape == (N, L, E)
    # tolerance loosened slightly vs pure-f32 because of the EUP approximate
    # reciprocal used for the softmax normalization
    assert jnp.allclose(out, ref, atol=2e-2, rtol=2e-2), (
        f"mismatch vs JAX reference, max abs err = {jnp.max(jnp.abs(out - ref))}")

    print("KERNEL_OK")
</pallas_src>

<mosaic_0001>
module attributes {stable_mosaic.version = 11 : i64} {
  func.func @_transformer_block_kernel(%arg0: i32, %arg1: memref<1x8x32xf32, #tpu.memory_space<vmem>>, %arg2: memref<1x8x8xf32, #tpu.memory_space<vmem>>, %arg3: memref<32x32xf32, #tpu.memory_space<vmem>>, %arg4: memref<32x32xf32, #tpu.memory_space<vmem>>, %arg5: memref<32x32xf32, #tpu.memory_space<vmem>>, %arg6: memref<32x32xf32, #tpu.memory_space<vmem>>, %arg7: memref<1x32xf32, #tpu.memory_space<vmem>>, %arg8: memref<1x32xf32, #tpu.memory_space<vmem>>, %arg9: memref<1x32xf32, #tpu.memory_space<vmem>>, %arg10: memref<32x128xf32, #tpu.memory_space<vmem>>, %arg11: memref<1x128xf32, #tpu.memory_space<vmem>>, %arg12: memref<128x32xf32, #tpu.memory_space<vmem>>, %arg13: memref<1x32xf32, #tpu.memory_space<vmem>>, %arg14: memref<1x32xf32, #tpu.memory_space<vmem>>, %arg15: memref<1x32xf32, #tpu.memory_space<vmem>>, %arg16: memref<1x8x32xf32, #tpu.memory_space<vmem>>) attributes {dimension_semantics = [#tpu.dimension_semantics<parallel>], iteration_bounds = array<i64: 2>, scalar_prefetch = 0 : i64, scratch_operands = 0 : i64, tpu.core_type = #tpu.core_type<tc>, window_params = [{transform_indices = @transform_0, window_bounds = array<i64: 1, 8, 32>}, {transform_indices = @transform_1, window_bounds = array<i64: 1, 8, 8>}, {pipeline_mode = #tpu.pipeline_mode<synchronous>, transform_indices = @transform_2, window_bounds = array<i64: 32, 32>}, {pipeline_mode = #tpu.pipeline_mode<synchronous>, transform_indices = @transform_3, window_bounds = array<i64: 32, 32>}, {pipeline_mode = #tpu.pipeline_mode<synchronous>, transform_indices = @transform_4, window_bounds = array<i64: 32, 32>}, {pipeline_mode = #tpu.pipeline_mode<synchronous>, transform_indices = @transform_5, window_bounds = array<i64: 32, 32>}, {pipeline_mode = #tpu.pipeline_mode<synchronous>, transform_indices = @transform_6, window_bounds = array<i64: 1, 32>}, {pipeline_mode = #tpu.pipeline_mode<synchronous>, transform_indices = @transform_7, window_bounds = array<i64: 1, 32>}, {pipeline_mode = #tpu.pipeline_mode<synchronous>, transform_indices = @transform_8, window_bounds = array<i64: 1, 32>}, {pipeline_mode = #tpu.pipeline_mode<synchronous>, transform_indices = @transform_9, window_bounds = array<i64: 32, 128>}, {pipeline_mode = #tpu.pipeline_mode<synchronous>, transform_indices = @transform_10, window_bounds = array<i64: 1, 128>}, {pipeline_mode = #tpu.pipeline_mode<synchronous>, transform_indices = @transform_11, window_bounds = array<i64: 128, 32>}, {pipeline_mode = #tpu.pipeline_mode<synchronous>, transform_indices = @transform_12, window_bounds = array<i64: 1, 32>}, {pipeline_mode = #tpu.pipeline_mode<synchronous>, transform_indices = @transform_13, window_bounds = array<i64: 1, 32>}, {pipeline_mode = #tpu.pipeline_mode<synchronous>, transform_indices = @transform_14, window_bounds = array<i64: 1, 32>}, {transform_indices = @transform_15, window_bounds = array<i64: 1, 8, 32>}]} {
    %c0 = arith.constant 0 : index
    %c0_0 = arith.constant 0 : index
    %c0_1 = arith.constant 0 : index
    %0 = vector.load %arg1[%c0, %c0_0, %c0_1] : memref<1x8x32xf32, #tpu.memory_space<vmem>>, vector<1x8x32xf32>
    %1 = vector.shape_cast %0 : vector<1x8x32xf32> to vector<8x32xf32>
    %c0_2 = arith.constant 0 : index
    %c0_3 = arith.constant 0 : index
    %c0_4 = arith.constant 0 : index
    %2 = vector.load %arg2[%c0_2, %c0_3, %c0_4] : memref<1x8x8xf32, #tpu.memory_space<vmem>>, vector<1x8x8xf32>
    %3 = vector.shape_cast %2 : vector<1x8x8xf32> to vector<8x8xf32>
    %c0_5 = arith.constant 0 : index
    %c0_6 = arith.constant 0 : index
    %4 = vector.load %arg3[%c0_5, %c0_6] : memref<32x32xf32, #tpu.memory_space<vmem>>, vector<32x32xf32>
    %cst = arith.constant dense<0.000000e+00> : vector<8x32xf32>
    %5 = tpu.matmul %1, %4, %cst {dimension_numbers = #tpu.dot_dimension_numbers<[1], [0], [0], [1], [0, 0, 1, 1], [], []>} : vector<8x32xf32>, vector<32x32xf32>, vector<8x32xf32> -> vector<8x32xf32>
    %c0_7 = arith.constant 0 : index
    %c0_8 = arith.constant 0 : index
    %6 = vector.load %arg4[%c0_7, %c0_8] : memref<32x32xf32, #tpu.memory_space<vmem>>, vector<32x32xf32>
    %cst_9 = arith.constant dense<0.000000e+00> : vector<8x32xf32>
    %7 = tpu.matmul %1, %6, %cst_9 {dimension_numbers = #tpu.dot_dimension_numbers<[1], [0], [0], [1], [0, 0, 1, 1], [], []>} : vector<8x32xf32>, vector<32x32xf32>, vector<8x32xf32> -> vector<8x32xf32>
    %c0_10 = arith.constant 0 : index
    %c0_11 = arith.constant 0 : index
    %8 = vector.load %arg5[%c0_10, %c0_11] : memref<32x32xf32, #tpu.memory_space<vmem>>, vector<32x32xf32>
    %cst_12 = arith.constant dense<0.000000e+00> : vector<8x32xf32>
    %9 = tpu.matmul %1, %8, %cst_12 {dimension_numbers = #tpu.dot_dimension_numbers<[1], [0], [0], [1], [0, 0, 1, 1], [], []>} : vector<8x32xf32>, vector<32x32xf32>, vector<8x32xf32> -> vector<8x32xf32>
    %c0_13 = arith.constant 0 : index
    %c0_14 = arith.constant 0 : index
    %10 = vector.load %arg6[%c0_13, %c0_14] : memref<32x32xf32, #tpu.memory_space<vmem>>, vector<32x32xf32>
    %cst_15 = arith.constant 0.000000e+00 : f32
    %11 = vector.broadcast %cst_15 : f32 to vector<8x32xf32>
    %12 = vector.extract_strided_slice %5 {offsets = [0, 0], sizes = [8, 8], strides = [1, 1]} : vector<8x32xf32> to vector<8x8xf32>
    %13 = vector.extract_strided_slice %7 {offsets = [0, 0], sizes = [8, 8], strides = [1, 1]} : vector<8x32xf32> to vector<8x8xf32>
    %14 = vector.extract_strided_slice %9 {offsets = [0, 0], sizes = [8, 8], strides = [1, 1]} : vector<8x32xf32> to vector<8x8xf32>
    %cst_16 = arith.constant dense<0.000000e+00> : vector<8x8xf32>
    %15 = tpu.matmul %12, %13, %cst_16 {dimension_numbers = #tpu.dot_dimension_numbers<[1], [1], [0], [0], [0, 0, 1, 0], [], []>} : vector<8x8xf32>, vector<8x8xf32>, vector<8x8xf32> -> vector<8x8xf32>
    %16 = arith.addf %15, %3 : vector<8x8xf32>
    %cst_17 = arith.constant 0.176776692 : f32
    %17 = vector.broadcast %cst_17 : f32 to vector<8x8xf32>
    %18 = arith.mulf %16, %17 : vector<8x8xf32>
    %cst_18 = arith.constant dense<0xFF800000> : vector<8xf32>
    %19 = vector.multi_reduction <maximumf>, %18, %cst_18 [1] : vector<8x8xf32> to vector<8xf32>
    %20 = vector.shape_cast %19 : vector<8xf32> to vector<8x1xf32>
    %21 = vector.broadcast %20 : vector<8x1xf32> to vector<8x8xf32>
    %22 = arith.subf %18, %21 : vector<8x8xf32>
    %23 = math.exp %22 : vector<8x8xf32>
    %cst_19 = arith.constant dense<0.000000e+00> : vector<8xf32>
    %24 = vector.multi_reduction <add>, %23, %cst_19 [1] : vector<8x8xf32> to vector<8xf32>
    %25 = vector.shape_cast %24 : vector<8xf32> to vector<8x1xf32>
    %26 = tpu.reciprocal %25 {approx = true} : vector<8x1xf32> -> vector<8x1xf32>
    %27 = vector.broadcast %26 : vector<8x1xf32> to vector<8x8xf32>
    %28 = arith.mulf %23, %27 : vector<8x8xf32>
    %cst_20 = arith.constant dense<0.000000e+00> : vector<8x8xf32>
    %29 = tpu.matmul %28, %14, %cst_20 {dimension_numbers = #tpu.dot_dimension_numbers<[1], [0], [0], [1], [0, 0, 1, 1], [], []>} : vector<8x8xf32>, vector<8x8xf32>, vector<8x8xf32> -> vector<8x8xf32>
    %30 = vector.extract_strided_slice %10 {offsets = [0, 0], sizes = [8, 32], strides = [1, 1]} : vector<32x32xf32> to vector<8x32xf32>
    %cst_21 = arith.constant dense<0.000000e+00> : vector<8x32xf32>
    %31 = tpu.matmul %29, %30, %cst_21 {dimension_numbers = #tpu.dot_dimension_numbers<[1], [0], [0], [1], [0, 0, 1, 1], [], []>} : vector<8x8xf32>, vector<8x32xf32>, vector<8x32xf32> -> vector<8x32xf32>
    %32 = arith.addf %11, %31 : vector<8x32xf32>
    %33 = vector.extract_strided_slice %5 {offsets = [0, 8], sizes = [8, 8], strides = [1, 1]} : vector<8x32xf32> to vector<8x8xf32>
    %34 = vector.extract_strided_slice %7 {offsets = [0, 8], sizes = [8, 8], strides = [1, 1]} : vector<8x32xf32> to vector<8x8xf32>
    %35 = vector.extract_strided_slice %9 {offsets = [0, 8], sizes = [8, 8], strides = [1, 1]} : vector<8x32xf32> to vector<8x8xf32>
    %cst_22 = arith.constant dense<0.000000e+00> : vector<8x8xf32>
    %36 = tpu.matmul %33, %34, %cst_22 {dimension_numbers = #tpu.dot_dimension_numbers<[1], [1], [0], [0], [0, 0, 1, 0], [], []>} : vector<8x8xf32>, vector<8x8xf32>, vector<8x8xf32> -> vector<8x8xf32>
    %37 = arith.addf %36, %3 : vector<8x8xf32>
    %cst_23 = arith.constant 0.176776692 : f32
    %38 = vector.broadcast %cst_23 : f32 to vector<8x8xf32>
    %39 = arith.mulf %37, %38 : vector<8x8xf32>
    %cst_24 = arith.constant dense<0xFF800000> : vector<8xf32>
    %40 = vector.multi_reduction <maximumf>, %39, %cst_24 [1] : vector<8x8xf32> to vector<8xf32>
    %41 = vector.shape_cast %40 : vector<8xf32> to vector<8x1xf32>
    %42 = vector.broadcast %41 : vector<8x1xf32> to vector<8x8xf32>
    %43 = arith.subf %39, %42 : vector<8x8xf32>
    %44 = math.exp %43 : vector<8x8xf32>
    %cst_25 = arith.constant dense<0.000000e+00> : vector<8xf32>
    %45 = vector.multi_reduction <add>, %44, %cst_25 [1] : vector<8x8xf32> to vector<8xf32>
    %46 = vector.shape_cast %45 : vector<8xf32> to vector<8x1xf32>
    %47 = tpu.reciprocal %46 {approx = true} : vector<8x1xf32> -> vector<8x1xf32>
    %48 = vector.broadcast %47 : vector<8x1xf32> to vector<8x8xf32>
    %49 = arith.mulf %44, %48 : vector<8x8xf32>
    %cst_26 = arith.constant dense<0.000000e+00> : vector<8x8xf32>
    %50 = tpu.matmul %49, %35, %cst_26 {dimension_numbers = #tpu.dot_dimension_numbers<[1], [0], [0], [1], [0, 0, 1, 1], [], []>} : vector<8x8xf32>, vector<8x8xf32>, vector<8x8xf32> -> vector<8x8xf32>
    %51 = vector.extract_strided_slice %10 {offsets = [8, 0], sizes = [8, 32], strides = [1, 1]} : vector<32x32xf32> to vector<8x32xf32>
    %cst_27 = arith.constant dense<0.000000e+00> : vector<8x32xf32>
    %52 = tpu.matmul %50, %51, %cst_27 {dimension_numbers = #tpu.dot_dimension_numbers<[1], [0], [0], [1], [0, 0, 1, 1], [], []>} : vector<8x8xf32>, vector<8x32xf32>, vector<8x32xf32> -> vector<8x32xf32>
    %53 = arith.addf %32, %52 : vector<8x32xf32>
    %54 = vector.extract_strided_slice %5 {offsets = [0, 16], sizes = [8, 8], strides = [1, 1]} : vector<8x32xf32> to vector<8x8xf32>
    %55 = vector.extract_strided_slice %7 {offsets = [0, 16], sizes = [8, 8], strides = [1, 1]} : vector<8x32xf32> to vector<8x8xf32>
    %56 = vector.extract_strided_slice %9 {offsets = [0, 16], sizes = [8, 8], strides = [1, 1]} : vector<8x32xf32> to vector<8x8xf32>
    %cst_28 = arith.constant dense<0.000000e+00> : vector<8x8xf32>
    %57 = tpu.matmul %54, %55, %cst_28 {dimension_numbers = #tpu.dot_dimension_numbers<[1], [1], [0], [0], [0, 0, 1, 0], [], []>} : vector<8x8xf32>, vector<8x8xf32>, vector<8x8xf32> -> vector<8x8xf32>
    %58 = arith.addf %57, %3 : vector<8x8xf32>
    %cst_29 = arith.constant 0.176776692 : f32
    %59 = vector.broadcast %cst_29 : f32 to vector<8x8xf32>
    %60 = arith.mulf %58, %59 : vector<8x8xf32>
    %cst_30 = arith.constant dense<0xFF800000> : vector<8xf32>
    %61 = vector.multi_reduction <maximumf>, %60, %cst_30 [1] : vector<8x8xf32> to vector<8xf32>
    %62 = vector.shape_cast %61 : vector<8xf32> to vector<8x1xf32>
    %63 = vector.broadcast %62 : vector<8x1xf32> to vector<8x8xf32>
    %64 = arith.subf %60, %63 : vector<8x8xf32>
    %65 = math.exp %64 : vector<8x8xf32>
    %cst_31 = arith.constant dense<0.000000e+00> : vector<8xf32>
    %66 = vector.multi_reduction <add>, %65, %cst_31 [1] : vector<8x8xf32> to vector<8xf32>
    %67 = vector.shape_cast %66 : vector<8xf32> to vector<8x1xf32>
    %68 = tpu.reciprocal %67 {approx = true} : vector<8x1xf32> -> vector<8x1xf32>
    %69 = vector.broadcast %68 : vector<8x1xf32> to vector<8x8xf32>
    %70 = arith.mulf %65, %69 : vector<8x8xf32>
    %cst_32 = arith.constant dense<0.000000e+00> : vector<8x8xf32>
    %71 = tpu.matmul %70, %56, %cst_32 {dimension_numbers = #tpu.dot_dimension_numbers<[1], [0], [0], [1], [0, 0, 1, 1], [], []>} : vector<8x8xf32>, vector<8x8xf32>, vector<8x8xf32> -> vector<8x8xf32>
    %72 = vector.extract_strided_slice %10 {offsets = [16, 0], sizes = [8, 32], strides = [1, 1]} : vector<32x32xf32> to vector<8x32xf32>
    %cst_33 = arith.constant dense<0.000000e+00> : vector<8x32xf32>
    %73 = tpu.matmul %71, %72, %cst_33 {dimension_numbers = #tpu.dot_dimension_numbers<[1], [0], [0], [1], [0, 0, 1, 1], [], []>} : vector<8x8xf32>, vector<8x32xf32>, vector<8x32xf32> -> vector<8x32xf32>
    %74 = arith.addf %53, %73 : vector<8x32xf32>
    %75 = vector.extract_strided_slice %5 {offsets = [0, 24], sizes = [8, 8], strides = [1, 1]} : vector<8x32xf32> to vector<8x8xf32>
    %76 = vector.extract_strided_slice %7 {offsets = [0, 24], sizes = [8, 8], strides = [1, 1]} : vector<8x32xf32> to vector<8x8xf32>
    %77 = vector.extract_strided_slice %9 {offsets = [0, 24], sizes = [8, 8], strides = [1, 1]} : vector<8x32xf32> to vector<8x8xf32>
    %cst_34 = arith.constant dense<0.000000e+00> : vector<8x8xf32>
    %78 = tpu.matmul %75, %76, %cst_34 {dimension_numbers = #tpu.dot_dimension_numbers<[1], [1], [0], [0], [0, 0, 1, 0], [], []>} : vector<8x8xf32>, vector<8x8xf32>, vector<8x8xf32> -> vector<8x8xf32>
    %79 = arith.addf %78, %3 : vector<8x8xf32>
    %cst_35 = arith.constant 0.176776692 : f32
    %80 = vector.broadcast %cst_35 : f32 to vector<8x8xf32>
    %81 = arith.mulf %79, %80 : vector<8x8xf32>
    %cst_36 = arith.constant dense<0xFF800000> : vector<8xf32>
    %82 = vector.multi_reduction <maximumf>, %81, %cst_36 [1] : vector<8x8xf32> to vector<8xf32>
    %83 = vector.shape_cast %82 : vector<8xf32> to vector<8x1xf32>
    %84 = vector.broadcast %83 : vector<8x1xf32> to vector<8x8xf32>
    %85 = arith.subf %81, %84 : vector<8x8xf32>
    %86 = math.exp %85 : vector<8x8xf32>
    %cst_37 = arith.constant dense<0.000000e+00> : vector<8xf32>
    %87 = vector.multi_reduction <add>, %86, %cst_37 [1] : vector<8x8xf32> to vector<8xf32>
    %88 = vector.shape_cast %87 : vector<8xf32> to vector<8x1xf32>
    %89 = tpu.reciprocal %88 {approx = true} : vector<8x1xf32> -> vector<8x1xf32>
    %90 = vector.broadcast %89 : vector<8x1xf32> to vector<8x8xf32>
    %91 = arith.mulf %86, %90 : vector<8x8xf32>
    %cst_38 = arith.constant dense<0.000000e+00> : vector<8x8xf32>
    %92 = tpu.matmul %91, %77, %cst_38 {dimension_numbers = #tpu.dot_dimension_numbers<[1], [0], [0], [1], [0, 0, 1, 1], [], []>} : vector<8x8xf32>, vector<8x8xf32>, vector<8x8xf32> -> vector<8x8xf32>
    %93 = vector.extract_strided_slice %10 {offsets = [24, 0], sizes = [8, 32], strides = [1, 1]} : vector<32x32xf32> to vector<8x32xf32>
    %cst_39 = arith.constant dense<0.000000e+00> : vector<8x32xf32>
    %94 = tpu.matmul %92, %93, %cst_39 {dimension_numbers = #tpu.dot_dimension_numbers<[1], [0], [0], [1], [0, 0, 1, 1], [], []>} : vector<8x8xf32>, vector<8x32xf32>, vector<8x32xf32> -> vector<8x32xf32>
    %95 = arith.addf %74, %94 : vector<8x32xf32>
    %c0_40 = arith.constant 0 : index
    %c0_41 = arith.constant 0 : index
    %96 = vector.load %arg7[%c0_40, %c0_41] : memref<1x32xf32, #tpu.memory_space<vmem>>, vector<1x32xf32>
    %97 = vector.broadcast %96 : vector<1x32xf32> to vector<8x32xf32>
    %98 = arith.addf %95, %97 : vector<8x32xf32>
    %99 = arith.addf %98, %1 : vector<8x32xf32>
    %cst_42 = arith.constant dense<0.000000e+00> : vector<8xf32>
    %100 = vector.multi_reduction <add>, %99, %cst_42 [1] : vector<8x32xf32> to vector<8xf32>
    %101 = vector.shape_cast %100 : vector<8xf32> to vector<8x1xf32>
    %cst_43 = arith.constant 3.200000e+01 : f32
    %102 = vector.broadcast %cst_43 : f32 to vector<8x1xf32>
    %103 = arith.divf %101, %102 : vector<8x1xf32>
    %104 = vector.broadcast %103 : vector<8x1xf32> to vector<8x32xf32>
    %105 = arith.subf %99, %104 : vector<8x32xf32>
    %106 = arith.mulf %105, %105 : vector<8x32xf32>
    %cst_44 = arith.constant dense<0.000000e+00> : vector<8xf32>
    %107 = vector.multi_reduction <add>, %106, %cst_44 [1] : vector<8x32xf32> to vector<8xf32>
    %108 = vector.shape_cast %107 : vector<8xf32> to vector<8x1xf32>
    %cst_45 = arith.constant 3.200000e+01 : f32
    %109 = vector.broadcast %cst_45 : f32 to vector<8x1xf32>
    %110 = arith.divf %108, %109 : vector<8x1xf32>
    %cst_46 = arith.constant 9.99999974E-6 : f32
    %111 = vector.broadcast %cst_46 : f32 to vector<8x1xf32>
    %112 = arith.addf %110, %111 : vector<8x1xf32>
    %113 = math.rsqrt %112 : vector<8x1xf32>
    %114 = vector.broadcast %113 : vector<8x1xf32> to vector<8x32xf32>
    %115 = arith.mulf %105, %114 : vector<8x32xf32>
    %c0_47 = arith.constant 0 : index
    %c0_48 = arith.constant 0 : index
    %116 = vector.load %arg8[%c0_47, %c0_48] : memref<1x32xf32, #tpu.memory_space<vmem>>, vector<1x32xf32>
    %117 = vector.broadcast %116 : vector<1x32xf32> to vector<8x32xf32>
    %118 = arith.mulf %115, %117 : vector<8x32xf32>
    %c0_49 = arith.constant 0 : index
    %c0_50 = arith.constant 0 : index
    %119 = vector.load %arg9[%c0_49, %c0_50] : memref<1x32xf32, #tpu.memory_space<vmem>>, vector<1x32xf32>
    %120 = vector.broadcast %119 : vector<1x32xf32> to vector<8x32xf32>
    %121 = arith.addf %118, %120 : vector<8x32xf32>
    %c0_51 = arith.constant 0 : index
    %c0_52 = arith.constant 0 : index
    %122 = vector.load %arg10[%c0_51, %c0_52] : memref<32x128xf32, #tpu.memory_space<vmem>>, vector<32x128xf32>
    %cst_53 = arith.constant dense<0.000000e+00> : vector<8x128xf32>
    %123 = tpu.matmul %121, %122, %cst_53 {dimension_numbers = #tpu.dot_dimension_numbers<[1], [0], [0], [1], [0, 0, 1, 1], [], []>} : vector<8x32xf32>, vector<32x128xf32>, vector<8x128xf32> -> vector<8x128xf32>
    %c0_54 = arith.constant 0 : index
    %c0_55 = arith.constant 0 : index
    %124 = vector.load %arg11[%c0_54, %c0_55] : memref<1x128xf32, #tpu.memory_space<vmem>>, vector<1x128xf32>
    %125 = vector.broadcast %124 : vector<1x128xf32> to vector<8x128xf32>
    %126 = arith.addf %123, %125 : vector<8x128xf32>
    %cst_56 = arith.constant 0.000000e+00 : f32
    %127 = vector.broadcast %cst_56 : f32 to vector<8x128xf32>
    %128 = arith.maximumf %126, %127 : vector<8x128xf32>
    %c0_57 = arith.constant 0 : index
    %c0_58 = arith.constant 0 : index
    %129 = vector.load %arg12[%c0_57, %c0_58] : memref<128x32xf32, #tpu.memory_space<vmem>>, vector<128x32xf32>
    %cst_59 = arith.constant dense<0.000000e+00> : vector<8x32xf32>
    %130 = tpu.matmul %128, %129, %cst_59 {dimension_numbers = #tpu.dot_dimension_numbers<[1], [0], [0], [1], [0, 0, 1, 1], [], []>} : vector<8x128xf32>, vector<128x32xf32>, vector<8x32xf32> -> vector<8x32xf32>
    %c0_60 = arith.constant 0 : index
    %c0_61 = arith.constant 0 : index
    %131 = vector.load %arg13[%c0_60, %c0_61] : memref<1x32xf32, #tpu.memory_space<vmem>>, vector<1x32xf32>
    %132 = vector.broadcast %131 : vector<1x32xf32> to vector<8x32xf32>
    %133 = arith.addf %130, %132 : vector<8x32xf32>
    %134 = arith.addf %133, %121 : vector<8x32xf32>
    %cst_62 = arith.constant dense<0.000000e+00> : vector<8xf32>
    %135 = vector.multi_reduction <add>, %134, %cst_62 [1] : vector<8x32xf32> to vector<8xf32>
    %136 = vector.shape_cast %135 : vector<8xf32> to vector<8x1xf32>
    %cst_63 = arith.constant 3.200000e+01 : f32
    %137 = vector.broadcast %cst_63 : f32 to vector<8x1xf32>
    %138 = arith.divf %136, %137 : vector<8x1xf32>
    %139 = vector.broadcast %138 : vector<8x1xf32> to vector<8x32xf32>
    %140 = arith.subf %134, %139 : vector<8x32xf32>
    %141 = arith.mulf %140, %140 : vector<8x32xf32>
    %cst_64 = arith.constant dense<0.000000e+00> : vector<8xf32>
    %142 = vector.multi_reduction <add>, %141, %cst_64 [1] : vector<8x32xf32> to vector<8xf32>
    %143 = vector.shape_cast %142 : vector<8xf32> to vector<8x1xf32>
    %cst_65 = arith.constant 3.200000e+01 : f32
    %144 = vector.broadcast %cst_65 : f32 to vector<8x1xf32>
    %145 = arith.divf %143, %144 : vector<8x1xf32>
    %cst_66 = arith.constant 9.99999974E-6 : f32
    %146 = vector.broadcast %cst_66 : f32 to vector<8x1xf32>
    %147 = arith.addf %145, %146 : vector<8x1xf32>
    %148 = math.rsqrt %147 : vector<8x1xf32>
    %149 = vector.broadcast %148 : vector<8x1xf32> to vector<8x32xf32>
    %150 = arith.mulf %140, %149 : vector<8x32xf32>
    %c0_67 = arith.constant 0 : index
    %c0_68 = arith.constant 0 : index
    %151 = vector.load %arg14[%c0_67, %c0_68] : memref<1x32xf32, #tpu.memory_space<vmem>>, vector<1x32xf32>
    %152 = vector.broadcast %151 : vector<1x32xf32> to vector<8x32xf32>
    %153 = arith.mulf %150, %152 : vector<8x32xf32>
    %c0_69 = arith.constant 0 : index
    %c0_70 = arith.constant 0 : index
    %154 = vector.load %arg15[%c0_69, %c0_70] : memref<1x32xf32, #tpu.memory_space<vmem>>, vector<1x32xf32>
    %155 = vector.broadcast %154 : vector<1x32xf32> to vector<8x32xf32>
    %156 = arith.addf %153, %155 : vector<8x32xf32>
    %c0_71 = arith.constant 0 : index
    %c0_72 = arith.constant 0 : index
    %c0_73 = arith.constant 0 : index
    %157 = vector.load %arg16[%c0_71, %c0_72, %c0_73] : memref<1x8x32xf32, #tpu.memory_space<vmem>>, vector<1x8x32xf32>
    %158 = vector.shape_cast %157 : vector<1x8x32xf32> to vector<8x32xf32>
    %159 = vector.shape_cast %156 : vector<8x32xf32> to vector<1x8x32xf32>
    tpu.vector_store %arg16[%c0_71, %c0_72, %c0_73], %159 {strides = array<i32>} : memref<1x8x32xf32, #tpu.memory_space<vmem>>, vector<1x8x32xf32>,
    return
  }
  func.func @transform_0(%arg0: i32) -> (i32, i32, i32) {
    %c0_i32 = arith.constant 0 : i32
    %c0_i32_0 = arith.constant 0 : i32
    %c0_i32_1 = arith.constant 0 : i32
    return %arg0, %c0_i32, %c0_i32_0 : i32, i32, i32
  }
  func.func @transform_1(%arg0: i32) -> (i32, i32, i32) {
    %c0_i32 = arith.constant 0 : i32
    %c0_i32_0 = arith.constant 0 : i32
    %c0_i32_1 = arith.constant 0 : i32
    return %arg0, %c0_i32, %c0_i32_0 : i32, i32, i32
  }
  func.func @transform_2(%arg0: i32) -> (i32, i32) {
    %c0_i32 = arith.constant 0 : i32
    %c0_i32_0 = arith.constant 0 : i32
    %c0_i32_1 = arith.constant 0 : i32
    return %c0_i32, %c0_i32_0 : i32, i32
  }
  func.func @transform_3(%arg0: i32) -> (i32, i32) {
    %c0_i32 = arith.constant 0 : i32
    %c0_i32_0 = arith.constant 0 : i32
    %c0_i32_1 = arith.constant 0 : i32
    return %c0_i32, %c0_i32_0 : i32, i32
  }
  func.func @transform_4(%arg0: i32) -> (i32, i32) {
    %c0_i32 = arith.constant 0 : i32
    %c0_i32_0 = arith.constant 0 : i32
    %c0_i32_1 = arith.constant 0 : i32
    return %c0_i32, %c0_i32_0 : i32, i32
  }
  func.func @transform_5(%arg0: i32) -> (i32, i32) {
    %c0_i32 = arith.constant 0 : i32
    %c0_i32_0 = arith.constant 0 : i32
    %c0_i32_1 = arith.constant 0 : i32
    return %c0_i32, %c0_i32_0 : i32, i32
  }
  func.func @transform_6(%arg0: i32) -> (i32, i32) {
    %c0_i32 = arith.constant 0 : i32
    %c0_i32_0 = arith.constant 0 : i32
    %c0_i32_1 = arith.constant 0 : i32
    return %c0_i32, %c0_i32_0 : i32, i32
  }
  func.func @transform_7(%arg0: i32) -> (i32, i32) {
    %c0_i32 = arith.constant 0 : i32
    %c0_i32_0 = arith.constant 0 : i32
    %c0_i32_1 = arith.constant 0 : i32
    return %c0_i32, %c0_i32_0 : i32, i32
  }
  func.func @transform_8(%arg0: i32) -> (i32, i32) {
    %c0_i32 = arith.constant 0 : i32
    %c0_i32_0 = arith.constant 0 : i32
    %c0_i32_1 = arith.constant 0 : i32
    return %c0_i32, %c0_i32_0 : i32, i32
  }
  func.func @transform_9(%arg0: i32) -> (i32, i32) {
    %c0_i32 = arith.constant 0 : i32
    %c0_i32_0 = arith.constant 0 : i32
    %c0_i32_1 = arith.constant 0 : i32
    return %c0_i32, %c0_i32_0 : i32, i32
  }
  func.func @transform_10(%arg0: i32) -> (i32, i32) {
    %c0_i32 = arith.constant 0 : i32
    %c0_i32_0 = arith.constant 0 : i32
    %c0_i32_1 = arith.constant 0 : i32
    return %c0_i32, %c0_i32_0 : i32, i32
  }
  func.func @transform_11(%arg0: i32) -> (i32, i32) {
    %c0_i32 = arith.constant 0 : i32
    %c0_i32_0 = arith.constant 0 : i32
    %c0_i32_1 = arith.constant 0 : i32
    return %c0_i32, %c0_i32_0 : i32, i32
  }
  func.func @transform_12(%arg0: i32) -> (i32, i32) {
    %c0_i32 = arith.constant 0 : i32
    %c0_i32_0 = arith.constant 0 : i32
    %c0_i32_1 = arith.constant 0 : i32
    return %c0_i32, %c0_i32_0 : i32, i32
  }
  func.func @transform_13(%arg0: i32) -> (i32, i32) {
    %c0_i32 = arith.constant 0 : i32
    %c0_i32_0 = arith.constant 0 : i32
    %c0_i32_1 = arith.constant 0 : i32
    return %c0_i32, %c0_i32_0 : i32, i32
  }
  func.func @transform_14(%arg0: i32) -> (i32, i32) {
    %c0_i32 = arith.constant 0 : i32
    %c0_i32_0 = arith.constant 0 : i32
    %c0_i32_1 = arith.constant 0 : i32
    return %c0_i32, %c0_i32_0 : i32, i32
  }
  func.func @transform_15(%arg0: i32) -> (i32, i32, i32) {
    %c0_i32 = arith.constant 0 : i32
    %c0_i32_0 = arith.constant 0 : i32
    %c0_i32_1 = arith.constant 0 : i32
    return %arg0, %c0_i32, %c0_i32_0 : i32, i32, i32
  }
}

</mosaic_0001>

<llo_original>
// kernel: tpu_custom_call.1
$region0: #{tpu_custom_call.1}
  #allocation0 [shape = 'u32[]', space=smem, size = 0x4, offset = 0x4, fixed_abs, tag = 'smem constant byte address 0x4 - core index']
  #allocation1 [shape = 'u32[72,128]{1,0:T(1,128)}', space=vmem, size = 0x9000, scoped, tag = 'internal scratch']
  %s0 = inlined_call_operand.hbm [shape: f32[2,8,32], index: 0, kind: input, shape index: {}]
  %s1 = inlined_call_operand.hbm [shape: f32[2,8,8], index: 1, kind: input, shape index: {}]
  %s2 = inlined_call_operand.vmem [shape: f32[32,32], index: 2, kind: input, shape index: {}]
  %s3 = inlined_call_operand.vmem [shape: f32[32,32], index: 3, kind: input, shape index: {}]
  %s4 = inlined_call_operand.vmem [shape: f32[32,32], index: 4, kind: input, shape index: {}]
  %s5 = inlined_call_operand.vmem [shape: f32[32,32], index: 5, kind: input, shape index: {}]
  %s6 = inlined_call_operand.vmem [shape: f32[1,32], index: 6, kind: input, shape index: {}]
  %s7 = inlined_call_operand.vmem [shape: f32[1,32], index: 7, kind: input, shape index: {}]
  %s8 = inlined_call_operand.vmem [shape: f32[1,32], index: 8, kind: input, shape index: {}]
  %s9 = inlined_call_operand.vmem [shape: f32[32,128], index: 9, kind: input, shape index: {}]
  %s10 = inlined_call_operand.vmem [shape: f32[1,128], index: 10, kind: input, shape index: {}]
  %s11 = inlined_call_operand.vmem [shape: f32[128,32], index: 11, kind: input, shape index: {}]
  %s12 = inlined_call_operand.vmem [shape: f32[1,32], index: 12, kind: input, shape index: {}]
  %s13 = inlined_call_operand.vmem [shape: f32[1,32], index: 13, kind: input, shape index: {}]
  %s14 = inlined_call_operand.vmem [shape: f32[1,32], index: 14, kind: input, shape index: {}]
  %s15 = inlined_call_operand.hbm [shape: f32[2,8,32], index: 15, kind: output, shape index: {}]
  %s16 = sld [smem:[#allocation0]]
  $region101: #{tpu_custom_call.1} parent=0
    _
  %s18 = ssub.s32 1, %s16
  %s19 = scalar_select 0, %s18, %s16
  $region1: #{tpu_custom_call.1} parent=0
    #allocation2 [shape = 'u8[8192]{0}', space=vmem, size = 0x2000, scoped, tag = 'input window, operand 0']
    #allocation3 [shape = 's32[2]{0}', space=sflag, size = 0x8, scoped, tag = 'scoped memory for tpu_custom_call.1']
    #allocation4 [shape = 's32[2]{0}', space=sflag, size = 0x8, scoped, tag = 'scoped memory for tpu_custom_call.1']
    #allocation5 [shape = 'u8[8192]{0}', space=vmem, size = 0x2000, scoped, tag = 'input window, operand 1']
    #allocation6 [shape = 's32[2]{0}', space=sflag, size = 0x8, scoped, tag = 'scoped memory for tpu_custom_call.1']
    #allocation7 [shape = 'u8[8192]{0}', space=vmem, size = 0x2000, scoped, tag = 'output window, operand 0']
    %20 = vsyncpa [#allocation3], 0
    %s21 = scalar_lea.sflag [#allocation3], 1
    %22 = vsyncpa %s21, 0
    %23 = vsyncpa [#allocation6], 0
    %s24 = scalar_lea.sflag [#allocation6], 1
    %25 = vsyncpa %s24, 0
    %26 = vsyncpa [#allocation4], 0
    %s27 = scalar_lea.sflag [#allocation4], 1
    %28 = vsyncpa %s27, 0
    loop: start=0, step=1, limit=4
    $region2: #{tpu_custom_call.1} parent=1 // loop_pre_header
      _
    $region3: #{tpu_custom_call.1} parent=1 // loop_header
      %s30 = sphi 0, %s34
      %p31 = scmp.ge.s32.totalorder %s30, 4
      %s40 = sphi 0, %s42
      %s43 = sphi 0, %s40
      %s44 = sphi 0, %s43
      %s60 = sphi 0, %s44
      %s66 = sphi 0, %s68
      %s69 = sphi 0, %s66
      %s70 = sphi 0, %s69
      %s86 = sphi 0, %s70
      %s90 = sphi 0, %s90
      %s92 = sphi 0, %s90
      %s93 = sphi 0, %s92
      %s107 = sphi 0, %s93
      %s111 = sphi 0, %s111
      %s113 = sphi 0, %s111
      %s114 = sphi 0, %s113
      %s128 = sphi 0, %s114
      %s132 = sphi 0, %s132
      %s134 = sphi 0, %s132
      %s135 = sphi 0, %s134
      %s149 = sphi 0, %s135
      %s153 = sphi 0, %s153
      %s155 = sphi 0, %s153
      %s156 = sphi 0, %s155
      %s170 = sphi 0, %s156
      %s174 = sphi 0, %s174
      %s176 = sphi 0, %s174
      %s177 = sphi 0, %s176
      %s191 = sphi 0, %s177
      %s195 = sphi 0, %s195
      %s197 = sphi 0, %s195
      %s198 = sphi 0, %s197
      %s212 = sphi 0, %s198
      %s216 = sphi 0, %s216
      %s218 = sphi 0, %s216
      %s219 = sphi 0, %s218
      %s233 = sphi 0, %s219
      %s237 = sphi 0, %s237
      %s239 = sphi 0, %s237
      %s240 = sphi 0, %s239
      %s254 = sphi 0, %s240
      %s258 = sphi 0, %s258
      %s260 = sphi 0, %s258
      %s261 = sphi 0, %s260
      %s275 = sphi 0, %s261
      %s279 = sphi 0, %s279
      %s281 = sphi 0, %s279
      %s282 = sphi 0, %s281
      %s296 = sphi 0, %s282
      %s300 = sphi 0, %s300
      %s302 = sphi 0, %s300
      %s303 = sphi 0, %s302
      %s317 = sphi 0, %s303
      %s321 = sphi 0, %s321
      %s323 = sphi 0, %s321
      %s324 = sphi 0, %s323
      %s338 = sphi 0, %s324
      %s342 = sphi 0, %s342
      %s344 = sphi 0, %s342
      %s345 = sphi 0, %s344
      %s359 = sphi 0, %s345
      %s365 = sphi 0, %s367
      %s368 = sphi 0, %s365
      %s369 = sphi 0, %s368
      %s385 = sphi 0, %s369
    $region4: #{tpu_custom_call.1} parent=1 // loop_header_branch
      %33 = sbr.rel (%p31) target = $region8
    $region5: #{tpu_custom_call.1} parent=1 // loop_body
      %s35 = ssub.s32 %s30, 1
      %s36 = ssub.s32 %s30, 2
      %s37 = sadd.s32 %s30, 1
      %s38 = ssub.s32 %s30, %s37
      %p39 = scmp.eq.s32.totalorder %s38, 0
      %s41 = sadd.s32 %s40, 1
      %s42 = scalar_select %p39, %s40, %s41
      %p45 = pneg %p39
      %p46 = scmp.eq.s32.totalorder %s30, 1
      %p47 = por %p45, %p46
      %p48 = scmp.ne.s32.totalorder %s40, %s43
      %p49 = scmp.eq.s32.totalorder %s30, 0
      %p50 = por %p48, %p49
      %p51 = scmp.ne.s32.totalorder %s40, %s43
      %p52 = scmp.eq.s32.totalorder %s35, 1
      %p53 = por %p51, %p52
      %p54 = scmp.ne.s32.totalorder %s43, %s44
      %p55 = scmp.eq.s32.totalorder %s35, 0
      %p56 = por %p54, %p55
      %p57 = scmp.ne.s32.totalorder %s43, %s44
      %p58 = scmp.eq.s32.totalorder %s36, 1
      %p59 = por %p57, %p58
      %p61 = scmp.ne.s32.totalorder %s44, %s60
      %p62 = scmp.eq.s32.totalorder %s36, 0
      %p63 = por %p61, %p62
      %s64 = ssub.s32 %s30, %s37
      %p65 = scmp.eq.s32.totalorder %s64, 0
      %s67 = sadd.s32 %s66, 1
      %s68 = scalar_select %p65, %s66, %s67
      %p71 = pneg %p65
      %p72 = scmp.eq.s32.totalorder %s30, 1
      %p73 = por %p71, %p72
      %p74 = scmp.ne.s32.totalorder %s66, %s69
      %p75 = scmp.eq.s32.totalorder %s30, 0
      %p76 = por %p74, %p75
      %p77 = scmp.ne.s32.totalorder %s66, %s69
      %p78 = scmp.eq.s32.totalorder %s35, 1
      %p79 = por %p77, %p78
      %p80 = scmp.ne.s32.totalorder %s69, %s70
      %p81 = scmp.eq.s32.totalorder %s35, 0
      %p82 = por %p80, %p81
      %p83 = scmp.ne.s32.totalorder %s69, %s70
      %p84 = scmp.eq.s32.totalorder %s36, 1
      %p85 = por %p83, %p84
      %p87 = scmp.ne.s32.totalorder %s70, %s86
      %p88 = scmp.eq.s32.totalorder %s36, 0
      %p89 = por %p87, %p88
      %s91 = sadd.s32 %s90, 1
      %p94 = scmp.eq.s32.totalorder %s30, 1
      %p95 = scmp.ne.s32.totalorder %s90, %s92
      %p96 = scmp.eq.s32.totalorder %s30, 0
      %p97 = por %p95, %p96
      %p98 = scmp.ne.s32.totalorder %s90, %s92
      %p99 = scmp.eq.s32.totalorder %s35, 1
      %p100 = por %p98, %p99
      %p101 = scmp.ne.s32.totalorder %s92, %s93
      %p102 = scmp.eq.s32.totalorder %s35, 0
      %p103 = por %p101, %p102
      %p104 = scmp.ne.s32.totalorder %s92, %s93
      %p105 = scmp.eq.s32.totalorder %s36, 1
      %p106 = por %p104, %p105
      %p108 = scmp.ne.s32.totalorder %s93, %s107
      %p109 = scmp.eq.s32.totalorder %s36, 0
      %p110 = por %p108, %p109
      %s112 = sadd.s32 %s111, 1
      %p115 = scmp.eq.s32.totalorder %s30, 1
      %p116 = scmp.ne.s32.totalorder %s111, %s113
      %p117 = scmp.eq.s32.totalorder %s30, 0
      %p118 = por %p116, %p117
      %p119 = scmp.ne.s32.totalorder %s111, %s113
      %p120 = scmp.eq.s32.totalorder %s35, 1
      %p121 = por %p119, %p120
      %p122 = scmp.ne.s32.totalorder %s113, %s114
      %p123 = scmp.eq.s32.totalorder %s35, 0
      %p124 = por %p122, %p123
      %p125 = scmp.ne.s32.totalorder %s113, %s114
      %p126 = scmp.eq.s32.totalorder %s36, 1
      %p127 = por %p125, %p126
      %p129 = scmp.ne.s32.totalorder %s114, %s128
      %p130 = scmp.eq.s32.totalorder %s36, 0
      %p131 = por %p129, %p130
      %s133 = sadd.s32 %s132, 1
      %p136 = scmp.eq.s32.totalorder %s30, 1
      %p137 = scmp.ne.s32.totalorder %s132, %s134
      %p138 = scmp.eq.s32.totalorder %s30, 0
      %p139 = por %p137, %p138
      %p140 = scmp.ne.s32.totalorder %s132, %s134
      %p141 = scmp.eq.s32.totalorder %s35, 1
      %p142 = por %p140, %p141
      %p143 = scmp.ne.s32.totalorder %s134, %s135
      %p144 = scmp.eq.s32.totalorder %s35, 0
      %p145 = por %p143, %p144
      %p146 = scmp.ne.s32.totalorder %s134, %s135
      %p147 = scmp.eq.s32.totalorder %s36, 1
      %p148 = por %p146, %p147
      %p150 = scmp.ne.s32.totalorder %s135, %s149
      %p151 = scmp.eq.s32.totalorder %s36, 0
      %p152 = por %p150, %p151
      %s154 = sadd.s32 %s153, 1
      %p157 = scmp.eq.s32.totalorder %s30, 1
      %p158 = scmp.ne.s32.totalorder %s153, %s155
      %p159 = scmp.eq.s32.totalorder %s30, 0
      %p160 = por %p158, %p159
      %p161 = scmp.ne.s32.totalorder %s153, %s155
      %p162 = scmp.eq.s32.totalorder %s35, 1
      %p163 = por %p161, %p162
      %p164 = scmp.ne.s32.totalorder %s155, %s156
      %p165 = scmp.eq.s32.totalorder %s35, 0
      %p166 = por %p164, %p165
      %p167 = scmp.ne.s32.totalorder %s155, %s156
      %p168 = scmp.eq.s32.totalorder %s36, 1
      %p169 = por %p167, %p168
      %p171 = scmp.ne.s32.totalorder %s156, %s170
      %p172 = scmp.eq.s32.totalorder %s36, 0
      %p173 = por %p171, %p172
      %s175 = sadd.s32 %s174, 1
      %p178 = scmp.eq.s32.totalorder %s30, 1
      %p179 = scmp.ne.s32.totalorder %s174, %s176
      %p180 = scmp.eq.s32.totalorder %s30, 0
      %p181 = por %p179, %p180
      %p182 = scmp.ne.s32.totalorder %s174, %s176
      %p183 = scmp.eq.s32.totalorder %s35, 1
      %p184 = por %p182, %p183
      %p185 = scmp.ne.s32.totalorder %s176, %s177
      %p186 = scmp.eq.s32.totalorder %s35, 0
      %p187 = por %p185, %p186
      %p188 = scmp.ne.s32.totalorder %s176, %s177
      %p189 = scmp.eq.s32.totalorder %s36, 1
      %p190 = por %p188, %p189
      %p192 = scmp.ne.s32.totalorder %s177, %s191
      %p193 = scmp.eq.s32.totalorder %s36, 0
      %p194 = por %p192, %p193
      %s196 = sadd.s32 %s195, 1
      %p199 = scmp.eq.s32.totalorder %s30, 1
      %p200 = scmp.ne.s32.totalorder %s195, %s197
      %p201 = scmp.eq.s32.totalorder %s30, 0
      %p202 = por %p200, %p201
      %p203 = scmp.ne.s32.totalorder %s195, %s197
      %p204 = scmp.eq.s32.totalorder %s35, 1
      %p205 = por %p203, %p204
      %p206 = scmp.ne.s32.totalorder %s197, %s198
      %p207 = scmp.eq.s32.totalorder %s35, 0
      %p208 = por %p206, %p207
      %p209 = scmp.ne.s32.totalorder %s197, %s198
      %p210 = scmp.eq.s32.totalorder %s36, 1
      %p211 = por %p209, %p210
      %p213 = scmp.ne.s32.totalorder %s198, %s212
      %p214 = scmp.eq.s32.totalorder %s36, 0
      %p215 = por %p213, %p214
      %s217 = sadd.s32 %s216, 1
      %p220 = scmp.eq.s32.totalorder %s30, 1
      %p221 = scmp.ne.s32.totalorder %s216, %s218
      %p222 = scmp.eq.s32.totalorder %s30, 0
      %p223 = por %p221, %p222
      %p224 = scmp.ne.s32.totalorder %s216, %s218
      %p225 = scmp.eq.s32.totalorder %s35, 1
      %p226 = por %p224, %p225
      %p227 = scmp.ne.s32.totalorder %s218, %s219
      %p228 = scmp.eq.s32.totalorder %s35, 0
      %p229 = por %p227, %p228
      %p230 = scmp.ne.s32.totalorder %s218, %s219
      %p231 = scmp.eq.s32.totalorder %s36, 1
      %p232 = por %p230, %p231
      %p234 = scmp.ne.s32.totalorder %s219, %s233
      %p235 = scmp.eq.s32.totalorder %s36, 0
      %p236 = por %p234, %p235
      %s238 = sadd.s32 %s237, 1
      %p241 = scmp.eq.s32.totalorder %s30, 1
      %p242 = scmp.ne.s32.totalorder %s237, %s239
      %p243 = scmp.eq.s32.totalorder %s30, 0
      %p244 = por %p242, %p243
      %p245 = scmp.ne.s32.totalorder %s237, %s239
      %p246 = scmp.eq.s32.totalorder %s35, 1
      %p247 = por %p245, %p246
      %p248 = scmp.ne.s32.totalorder %s239, %s240
      %p249 = scmp.eq.s32.totalorder %s35, 0
      %p250 = por %p248, %p249
      %p251 = scmp.ne.s32.totalorder %s239, %s240
      %p252 = scmp.eq.s32.totalorder %s36, 1
      %p253 = por %p251, %p252
      %p255 = scmp.ne.s32.totalorder %s240, %s254
      %p256 = scmp.eq.s32.totalorder %s36, 0
      %p257 = por %p255, %p256
      %s259 = sadd.s32 %s258, 1
      %p262 = scmp.eq.s32.totalorder %s30, 1
      %p263 = scmp.ne.s32.totalorder %s258, %s260
      %p264 = scmp.eq.s32.totalorder %s30, 0
      %p265 = por %p263, %p264
      %p266 = scmp.ne.s32.totalorder %s258, %s260
      %p267 = scmp.eq.s32.totalorder %s35, 1
      %p268 = por %p266, %p267
      %p269 = scmp.ne.s32.totalorder %s260, %s261
      %p270 = scmp.eq.s32.totalorder %s35, 0
      %p271 = por %p269, %p270
      %p272 = scmp.ne.s32.totalorder %s260, %s261
      %p273 = scmp.eq.s32.totalorder %s36, 1
      %p274 = por %p272, %p273
      %p276 = scmp.ne.s32.totalorder %s261, %s275
      %p277 = scmp.eq.s32.totalorder %s36, 0
      %p278 = por %p276, %p277
      %s280 = sadd.s32 %s279, 1
      %p283 = scmp.eq.s32.totalorder %s30, 1
      %p284 = scmp.ne.s32.totalorder %s279, %s281
      %p285 = scmp.eq.s32.totalorder %s30, 0
      %p286 = por %p284, %p285
      %p287 = scmp.ne.s32.totalorder %s279, %s281
      %p288 = scmp.eq.s32.totalorder %s35, 1
      %p289 = por %p287, %p288
      %p290 = scmp.ne.s32.totalorder %s281, %s282
      %p291 = scmp.eq.s32.totalorder %s35, 0
      %p292 = por %p290, %p291
      %p293 = scmp.ne.s32.totalorder %s281, %s282
      %p294 = scmp.eq.s32.totalorder %s36, 1
      %p295 = por %p293, %p294
      %p297 = scmp.ne.s32.totalorder %s282, %s296
      %p298 = scmp.eq.s32.totalorder %s36, 0
      %p299 = por %p297, %p298
      %s301 = sadd.s32 %s300, 1
      %p304 = scmp.eq.s32.totalorder %s30, 1
      %p305 = scmp.ne.s32.totalorder %s300, %s302
      %p306 = scmp.eq.s32.totalorder %s30, 0
      %p307 = por %p305, %p306
      %p308 = scmp.ne.s32.totalorder %s300, %s302
      %p309 = scmp.eq.s32.totalorder %s35, 1
      %p310 = por %p308, %p309
      %p311 = scmp.ne.s32.totalorder %s302, %s303
      %p312 = scmp.eq.s32.totalorder %s35, 0
      %p313 = por %p311, %p312
      %p314 = scmp.ne.s32.totalorder %s302, %s303
      %p315 = scmp.eq.s32.totalorder %s36, 1
      %p316 = por %p314, %p315
      %p318 = scmp.ne.s32.totalorder %s303, %s317
      %p319 = scmp.eq.s32.totalorder %s36, 0
      %p320 = por %p318, %p319
      %s322 = sadd.s32 %s321, 1
      %p325 = scmp.eq.s32.totalorder %s30, 1
      %p326 = scmp.ne.s32.totalorder %s321, %s323
      %p327 = scmp.eq.s32.totalorder %s30, 0
      %p328 = por %p326, %p327
      %p329 = scmp.ne.s32.totalorder %s321, %s323
      %p330 = scmp.eq.s32.totalorder %s35, 1
      %p331 = por %p329, %p330
      %p332 = scmp.ne.s32.totalorder %s323, %s324
      %p333 = scmp.eq.s32.totalorder %s35, 0
      %p334 = por %p332, %p333
      %p335 = scmp.ne.s32.totalorder %s323, %s324
      %p336 = scmp.eq.s32.totalorder %s36, 1
      %p337 = por %p335, %p336
      %p339 = scmp.ne.s32.totalorder %s324, %s338
      %p340 = scmp.eq.s32.totalorder %s36, 0
      %p341 = por %p339, %p340
      %s343 = sadd.s32 %s342, 1
      %p346 = scmp.eq.s32.totalorder %s30, 1
      %p347 = scmp.ne.s32.totalorder %s342, %s344
      %p348 = scmp.eq.s32.totalorder %s30, 0
      %p349 = por %p347, %p348
      %p350 = scmp.ne.s32.totalorder %s342, %s344
      %p351 = scmp.eq.s32.totalorder %s35, 1
      %p352 = por %p350, %p351
      %p353 = scmp.ne.s32.totalorder %s344, %s345
      %p354 = scmp.eq.s32.totalorder %s35, 0
      %p355 = por %p353, %p354
      %p356 = scmp.ne.s32.totalorder %s344, %s345
      %p357 = scmp.eq.s32.totalorder %s36, 1
      %p358 = por %p356, %p357
      %p360 = scmp.ne.s32.totalorder %s345, %s359
      %p361 = scmp.eq.s32.totalorder %s36, 0
      %p362 = por %p360, %p361
      %s363 = ssub.s32 %s30, %s37
      %p364 = scmp.eq.s32.totalorder %s363, 0
      %s366 = sadd.s32 %s365, 1
      %s367 = scalar_select %p364, %s365, %s366
      %p370 = pneg %p364
      %p371 = scmp.eq.s32.totalorder %s30, 1
      %p372 = por %p370, %p371
      %p373 = scmp.ne.s32.totalorder %s365, %s368
      %p374 = scmp.eq.s32.totalorder %s30, 0
      %p375 = por %p373, %p374
      %p376 = scmp.ne.s32.totalorder %s365, %s368
      %p377 = scmp.eq.s32.totalorder %s35, 1
      %p378 = por %p376, %p377
      %p379 = scmp.ne.s32.totalorder %s368, %s369
      %p380 = scmp.eq.s32.totalorder %s35, 0
      %p381 = por %p379, %p380
      %p382 = scmp.ne.s32.totalorder %s368, %s369
      %p383 = scmp.eq.s32.totalorder %s36, 1
      %p384 = por %p382, %p383
      %p386 = scmp.ne.s32.totalorder %s369, %s385
      %p387 = scmp.eq.s32.totalorder %s36, 0
      %p388 = por %p386, %p387
      %p389 = scmp.le.s32.totalorder 1, %s30
      %p390 = scmp.lt.s32.totalorder %s30, 3
      %p391 = pnand %p389, %p390
      %p392 = pneg %p391
      // Predicated region
      $region9: #{tpu_custom_call.1} parent=5 // pred_check
        _
      $region10: #{tpu_custom_call.1} parent=5 // pred_check_branch
        %394 = sbr.rel (%p391) target = $region12
      $region11: #{tpu_custom_call.1} parent=5 // pred_region
        %s395 = ssub.s32 %s30, 1
        // Predicated region
        $region13: #{tpu_custom_call.1} parent=11 // pred_check
          %p396 = pneg %p103
        $region14: #{tpu_custom_call.1} parent=11 // pred_check_branch
          %398 = sbr.rel (%p396) target = $region16
        $region15: #{tpu_custom_call.1} parent=11 // pred_region
          _
        $region16: #{tpu_custom_call.1} parent=11 // pred_fallthru
          _
        // Predicated region
        $region17: #{tpu_custom_call.1} parent=11 // pred_check
          %p399 = pneg %p124
        $region18: #{tpu_custom_call.1} parent=11 // pred_check_branch
          %401 = sbr.rel (%p399) target = $region20
        $region19: #{tpu_custom_call.1} parent=11 // pred_region
          _
        $region20: #{tpu_custom_call.1} parent=11 // pred_fallthru
          _
        // Predicated region
        $region21: #{tpu_custom_call.1} parent=11 // pred_check
          %p402 = pneg %p145
        $region22: #{tpu_custom_call.1} parent=11 // pred_check_branch
          %404 = sbr.rel (%p402) target = $region24
        $region23: #{tpu_custom_call.1} parent=11 // pred_region
          _
        $region24: #{tpu_custom_call.1} parent=11 // pred_fallthru
          _
        // Predicated region
        $region25: #{tpu_custom_call.1} parent=11 // pred_check
          %p405 = pneg %p166
        $region26: #{tpu_custom_call.1} parent=11 // pred_check_branch
          %407 = sbr.rel (%p405) target = $region28
        $region27: #{tpu_custom_call.1} parent=11 // pred_region
          _
        $region28: #{tpu_custom_call.1} parent=11 // pred_fallthru
          _
        // Predicated region
        $region29: #{tpu_custom_call.1} parent=11 // pred_check
          %p408 = pneg %p187
        $region30: #{tpu_custom_call.1} parent=11 // pred_check_branch
          %410 = sbr.rel (%p408) target = $region32
        $region31: #{tpu_custom_call.1} parent=11 // pred_region
          _
        $region32: #{tpu_custom_call.1} parent=11 // pred_fallthru
          _
        // Predicated region
        $region33: #{tpu_custom_call.1} parent=11 // pred_check
          %p411 = pneg %p208
        $region34: #{tpu_custom_call.1} parent=11 // pred_check_branch
          %413 = sbr.rel (%p411) target = $region36
        $region35: #{tpu_custom_call.1} parent=11 // pred_region
          _
        $region36: #{tpu_custom_call.1} parent=11 // pred_fallthru
          _
        // Predicated region
        $region37: #{tpu_custom_call.1} parent=11 // pred_check
          %p414 = pneg %p229
        $region38: #{tpu_custom_call.1} parent=11 // pred_check_branch
          %416 = sbr.rel (%p414) target = $region40
        $region39: #{tpu_custom_call.1} parent=11 // pred_region
          _
        $region40: #{tpu_custom_call.1} parent=11 // pred_fallthru
          _
        // Predicated region
        $region41: #{tpu_custom_call.1} parent=11 // pred_check
          %p417 = pneg %p250
        $region42: #{tpu_custom_call.1} parent=11 // pred_check_branch
          %419 = sbr.rel (%p417) target = $region44
        $region43: #{tpu_custom_call.1} parent=11 // pred_region
          _
        $region44: #{tpu_custom_call.1} parent=11 // pred_fallthru
          _
        // Predicated region
        $region45: #{tpu_custom_call.1} parent=11 // pred_check
          %p420 = pneg %p271
        $region46: #{tpu_custom_call.1} parent=11 // pred_check_branch
          %422 = sbr.rel (%p420) target = $region48
        $region47: #{tpu_custom_call.1} parent=11 // pred_region
          _
        $region48: #{tpu_custom_call.1} parent=11 // pred_fallthru
          _
        // Predicated region
        $region49: #{tpu_custom_call.1} parent=11 // pred_check
          %p423 = pneg %p292
        $region50: #{tpu_custom_call.1} parent=11 // pred_check_branch
          %425 = sbr.rel (%p423) target = $region52
        $region51: #{tpu_custom_call.1} parent=11 // pred_region
          _
        $region52: #{tpu_custom_call.1} parent=11 // pred_fallthru
          _
        // Predicated region
        $region53: #{tpu_custom_call.1} parent=11 // pred_check
          %p426 = pneg %p313
        $region54: #{tpu_custom_call.1} parent=11 // pred_check_branch
          %428 = sbr.rel (%p426) target = $region56
        $region55: #{tpu_custom_call.1} parent=11 // pred_region
          _
        $region56: #{tpu_custom_call.1} parent=11 // pred_fallthru
          _
        // Predicated region
        $region57: #{tpu_custom_call.1} parent=11 // pred_check
          %p429 = pneg %p334
        $region58: #{tpu_custom_call.1} parent=11 // pred_check_branch
          %431 = sbr.rel (%p429) target = $region60
        $region59: #{tpu_custom_call.1} parent=11 // pred_region
          _
        $region60: #{tpu_custom_call.1} parent=11 // pred_fallthru
          _
        // Predicated region
        $region61: #{tpu_custom_call.1} parent=11 // pred_check
          %p432 = pneg %p355
        $region62: #{tpu_custom_call.1} parent=11 // pred_check_branch
          %434 = sbr.rel (%p432) target = $region64
        $region63: #{tpu_custom_call.1} parent=11 // pred_region
          _
        $region64: #{tpu_custom_call.1} parent=11 // pred_fallthru
          _
      $region12: #{tpu_custom_call.1} parent=5 // pred_fallthru
        _
      %p435 = scmp.lt.s32.totalorder %s30, 2
      // Predicated region
      $region65: #{tpu_custom_call.1} parent=5 // pred_check
        %p436 = pneg %p435
      $region66: #{tpu_custom_call.1} parent=5 // pred_check_branch
        %438 = sbr.rel (%p436) target = $region68
      $region67: #{tpu_custom_call.1} parent=5 // pred_region
        // Predicated region
        $region69: #{tpu_custom_call.1} parent=67 // pred_check
          %p439 = pneg %p50
        $region70: #{tpu_custom_call.1} parent=67 // pred_check_branch
          %441 = sbr.rel (%p439) target = $region72
        $region71: #{tpu_custom_call.1} parent=67 // pred_region
          %s442 = sand.u32 %s40, 1
          %s443 = scalar_lea.sflag [#allocation3], %s442
          %s444 = sand.u32 %s40, 1
          %s445 = smul.addr %s444, 8
          %s446 = scalar_lea.vmem [#allocation2], %s445
          %448 = vsyncadd %s443, 0
          %s449 = smul.addr %s30, 8
          %s450 = scalar_lea.hbm %s0, %s449
          %s452 = sshll.u32 %s450, 4
          %s453 = int_to_ptr.hbm [resolvable:$true] %s452
          %s454 = sshll.u32 %s446, 4
          %s455 = int_to_ptr.vmem [resolvable:$true] %s454
          %457 = dma.hbm_to_vmem [thread:$0]  %s453, 128, %s455, %s443
        $region72: #{tpu_custom_call.1} parent=67 // pred_fallthru
          _
        // Predicated region
        $region73: #{tpu_custom_call.1} parent=67 // pred_check
          %p458 = pneg %p76
        $region74: #{tpu_custom_call.1} parent=67 // pred_check_branch
          %460 = sbr.rel (%p458) target = $region76
        $region75: #{tpu_custom_call.1} parent=67 // pred_region
          %s461 = sand.u32 %s66, 1
          %s462 = scalar_lea.sflag [#allocation6], %s461
          %s463 = sand.u32 %s66, 1
          %s464 = smul.addr %s463, 8
          %s465 = scalar_lea.vmem [#allocation5], %s464
          %467 = vsyncadd %s462, 0
          %s468 = smul.addr %s30, 8
          %s469 = scalar_lea.hbm %s1, %s468
          %s471 = sshll.u32 %s469, 4
          %s472 = int_to_ptr.hbm [resolvable:$true] %s471
          %s473 = sshll.u32 %s465, 4
          %s474 = int_to_ptr.vmem [resolvable:$true] %s473
          %476 = dma.hbm_to_vmem [thread:$0]  %s472, 128, %s474, %s462
        $region76: #{tpu_custom_call.1} parent=67 // pred_fallthru
          _
      $region68: #{tpu_custom_call.1} parent=5 // pred_fallthru
        _
      %p477 = scmp.le.s32.totalorder 1, %s30
      %p478 = scmp.lt.s32.totalorder %s30, 3
      %p479 = pnand %p477, %p478
      %p480 = pneg %p479
      // Predicated region
      $region77: #{tpu_custom_call.1} parent=5 // pred_check
        _
      $region78: #{tpu_custom_call.1} parent=5 // pred_check_branch
        %482 = sbr.rel (%p479) target = $region80
      $region79: #{tpu_custom_call.1} parent=5 // pred_region
        %s483 = ssub.s32 %s30, 1
        %s484 = sand.u32 %s43, 1
        %s485 = scalar_lea.sflag [#allocation3], %s484
        %s486 = sand.u32 %s43, 1
        %s487 = smul.addr %s486, 8
        %s488 = scalar_lea.vmem [#allocation2], %s487
        // Predicated region
        $region81: #{tpu_custom_call.1} parent=79 // pred_check
          %p489 = pneg %p56
        $region82: #{tpu_custom_call.1} parent=79 // pred_check_branch
          %491 = sbr.rel (%p489) target = $region84
        $region83: #{tpu_custom_call.1} parent=79 // pred_region
          %493 = dma.done %s485, 128
        $region84: #{tpu_custom_call.1} parent=79 // pred_fallthru
          _
        %s494 = sand.u32 %s69, 1
        %s495 = scalar_lea.sflag [#allocation6], %s494
        %s496 = sand.u32 %s69, 1
        %s497 = smul.addr %s496, 8
        %s498 = scalar_lea.vmem [#allocation5], %s497
        // Predicated region
        $region85: #{tpu_custom_call.1} parent=79 // pred_check
          %p499 = pneg %p82
        $region86: #{tpu_custom_call.1} parent=79 // pred_check_branch
          %501 = sbr.rel (%p499) target = $region88
        $region87: #{tpu_custom_call.1} parent=79 // pred_region
          %503 = dma.done %s495, 128
        $region88: #{tpu_custom_call.1} parent=79 // pred_fallthru
          _
        %s504 = sand.u32 %s43, 1
        %s505 = scalar_lea.sflag [#allocation3], %s504
        %s506 = sand.u32 %s43, 1
        %s507 = smul.addr %s506, 8
        %s508 = scalar_lea.vmem [#allocation2], %s507
        %p509 = pneg %p56
        %p510 = pneg %p53
        %s511 = sand.u32 %s69, 1
        %s512 = scalar_lea.sflag [#allocation6], %s511
        %s513 = sand.u32 %s69, 1
        %s514 = smul.addr %s513, 8
        %s515 = scalar_lea.vmem [#allocation5], %s514
        %p516 = pneg %p82
        %p517 = pneg %p79
        %p518 = pneg %p103
        %p519 = pneg %p100
        %p520 = pneg %p124
        %p521 = pneg %p121
        %p522 = pneg %p145
        %p523 = pneg %p142
        %p524 = pneg %p166
        %p525 = pneg %p163
        %p526 = pneg %p187
        %p527 = pneg %p184
        %p528 = pneg %p208
        %p529 = pneg %p205
        %p530 = pneg %p229
        %p531 = pneg %p226
        %p532 = pneg %p250
        %p533 = pneg %p247
        %p534 = pneg %p271
        %p535 = pneg %p268
        %p536 = pneg %p292
        %p537 = pneg %p289
        %p538 = pneg %p313
        %p539 = pneg %p310
        %p540 = pneg %p334
        %p541 = pneg %p331
        %p542 = pneg %p355
        %p543 = pneg %p352
        %p544 = pneg %p381
        %p545 = pneg %p378
        %s546 = sand.u32 %s368, 1
        %s547 = scalar_lea.sflag [#allocation4], %s546
        %s548 = sand.u32 %s368, 1
        %s549 = smul.addr %s548, 8
        %s550 = scalar_lea.vmem [#allocation7], %s549
        %v551 = vld [vmem:[%s488] sm:$0xff]
        %v552 = vld [vmem:[%s498] sm:$0xff]
        %v553 = vld [vmem:[%s2] sm:$0xff]
        %v554 = vld [vmem:[%s2 + $0x8] sm:$0xff]
        %v555 = vld [vmem:[%s2 + $0x10] sm:$0xff]
        %v556 = vld [vmem:[%s2 + $0x18] sm:$0xff]
        %vm557 = vcmask 261120
        %v559 = vsel %vm557, %v551, 0
        %561 = vmatpush.msra.mxu0 0.0
        %562 = vmatpush.msra.mxu0 0.0
        %563 = vmatpush.msra.mxu0 0.0
        %564 = vmatpush.msra.mxu0 0.0
        %565 = vmatpush.msra.mxu0 0.0
        %566 = vmatpush.msra.mxu0 0.0
        %567 = vmatpush.msra.mxu0 0.0
        %568 = vmatpush.msra.mxu0 0.0
        %569 = vmatpush.msra.mxu0 0.0
        %570 = vmatpush.msra.mxu0 0.0
        %571 = vmatpush.msra.mxu0 0.0
        %572 = vmatpush.msra.mxu0 0.0
        %573 = vmatpush.msra.mxu0 %v556
        %574 = vmatpush.msra.mxu0 %v555
        %575 = vmatpush.msra.mxu0 %v554
        %576 = vmatpush.msra.mxu0 %v553
        %577 = vmatmul.f32.gmra.mxu0 %v559
        %v578 = vpop.f32.mrf.mxu0
        %v579 = vadd.f32 0.0, %v578
        %580 = vdwg.mxu0
        %v581 = vld [vmem:[%s3] sm:$0xff]
        %v582 = vld [vmem:[%s3 + $0x8] sm:$0xff]
        %v583 = vld [vmem:[%s3 + $0x10] sm:$0xff]
        %v584 = vld [vmem:[%s3 + $0x18] sm:$0xff]
        %585 = vmatpush.msra.mxu0 0.0
        %586 = vmatpush.msra.mxu0 0.0
        %587 = vmatpush.msra.mxu0 0.0
        %588 = vmatpush.msra.mxu0 0.0
        %589 = vmatpush.msra.mxu0 0.0
        %590 = vmatpush.msra.mxu0 0.0
        %591 = vmatpush.msra.mxu0 0.0
        %592 = vmatpush.msra.mxu0 0.0
        %593 = vmatpush.msra.mxu0 0.0
        %594 = vmatpush.msra.mxu0 0.0
        %595 = vmatpush.msra.mxu0 0.0
        %596 = vmatpush.msra.mxu0 0.0
        %597 = vmatpush.msra.mxu0 %v584
        %598 = vmatpush.msra.mxu0 %v583
        %599 = vmatpush.msra.mxu0 %v582
        %600 = vmatpush.msra.mxu0 %v581
        %601 = vmatmul.f32.gmra.mxu0 %v559
        %v602 = vpop.f32.mrf.mxu0
        %v603 = vadd.f32 0.0, %v602
        %604 = vdwg.mxu0
        %v605 = vld [vmem:[%s4] sm:$0xff]
        %v606 = vld [vmem:[%s4 + $0x8] sm:$0xff]
        %v607 = vld [vmem:[%s4 + $0x10] sm:$0xff]
        %v608 = vld [vmem:[%s4 + $0x18] sm:$0xff]
        %609 = vmatpush.msra.mxu0 0.0
        %610 = vmatpush.msra.mxu0 0.0
        %611 = vmatpush.msra.mxu0 0.0
        %612 = vmatpush.msra.mxu0 0.0
        %613 = vmatpush.msra.mxu0 0.0
        %614 = vmatpush.msra.mxu0 0.0
        %615 = vmatpush.msra.mxu0 0.0
        %616 = vmatpush.msra.mxu0 0.0
        %617 = vmatpush.msra.mxu0 0.0
        %618 = vmatpush.msra.mxu0 0.0
        %619 = vmatpush.msra.mxu0 0.0
        %620 = vmatpush.msra.mxu0 0.0
        %621 = vmatpush.msra.mxu0 %v608
        %622 = vmatpush.msra.mxu0 %v607
        %623 = vmatpush.msra.mxu0 %v606
        %624 = vmatpush.msra.mxu0 %v605
        %625 = vmatmul.f32.gmra.mxu0 %v559
        %v626 = vpop.f32.mrf.mxu0
        %v627 = vadd.f32 0.0, %v626
        %628 = vdwg.mxu0
        %v629 = vld [vmem:[%s5] sm:$0xff]
        %v630 = vld [vmem:[%s5 + $0x8] sm:$0xff]
        %v631 = vld [vmem:[%s5 + $0x10] sm:$0xff]
        %v632 = vld [vmem:[%s5 + $0x18] sm:$0xff]
        %vm633 = vcmask 64512
        %v635 = vsel %vm633, %v579, 0
        %v638 = vsel %vm633, %v603, 0
        %640 = vmatpush.xpose.msra.mxu0 0.0
        %641 = vmatpush.xpose.msra.mxu0 0.0
        %642 = vmatpush.xpose.msra.mxu0 0.0
        %643 = vmatpush.xpose.msra.mxu0 0.0
        %644 = vmatpush.xpose.msra.mxu0 0.0
        %645 = vmatpush.xpose.msra.mxu0 0.0
        %646 = vmatpush.xpose.msra.mxu0 0.0
        %647 = vmatpush.xpose.msra.mxu0 0.0
        %648 = vmatpush.xpose.msra.mxu0 0.0
        %649 = vmatpush.xpose.msra.mxu0 0.0
        %650 = vmatpush.xpose.msra.mxu0 0.0
        %651 = vmatpush.xpose.msra.mxu0 0.0
        %652 = vmatpush.xpose.msra.mxu0 0.0
        %653 = vmatpush.xpose.msra.mxu0 0.0
        %654 = vmatpush.xpose.msra.mxu0 0.0
        %655 = vmatpush.xpose.msra.mxu0 %v638
        %656 = vmatmul.f32.gmra.mxu0 %v635
        %v657 = vpop.f32.mrf.mxu0
        %v658 = vadd.f32 %v552, %v657
        %659 = vdwg.mxu0
        %v660 = vmul.f32 %v658, 0.17677669
        %v661 = vsel %vm633, %v660, -inf
        %662 = vmax.xlane.f32.xlu0 %v661
        %v663 = vpop.xlane.xlu0 %662
        %v664 = vsub.f32 %v660, %v663
        %v665 = vmul.f32 %v664, 1.442695
        %v666 = vpow.pop %v665
        %v667 = vsel %vm633, %v666, 0.0
        %668 = vadd.xlane.f32.xlu0 %v667
        %v669 = vpop.xlane.xlu0 %668
        %v670 = vrcp.pop %v669
        %v671 = vmul.f32 %v666, %v670
        %v673 = vsel %vm633, %v671, 0
        %675 = vmatpush.msra.mxu0 0.0
        %676 = vmatpush.msra.mxu0 0.0
        %677 = vmatpush.msra.mxu0 0.0
        %678 = vmatpush.msra.mxu0 0.0
        %679 = vmatpush.msra.mxu0 0.0
        %680 = vmatpush.msra.mxu0 0.0
        %681 = vmatpush.msra.mxu0 0.0
        %682 = vmatpush.msra.mxu0 0.0
        %683 = vmatpush.msra.mxu0 0.0
        %684 = vmatpush.msra.mxu0 0.0
        %685 = vmatpush.msra.mxu0 0.0
        %686 = vmatpush.msra.mxu0 0.0
        %687 = vmatpush.msra.mxu0 0.0
        %688 = vmatpush.msra.mxu0 0.0
        %689 = vmatpush.msra.mxu0 0.0
        %690 = vmatpush.msra.mxu0 %v627
        %691 = vmatmul.f32.gmra.mxu0 %v673
        %v692 = vpop.f32.mrf.mxu0
        %v693 = vadd.f32 0.0, %v692
        %694 = vdwg.mxu0
        %695 = vrot.lane.b32.xlu0 %v579, 120
        %v696 = vpop.permute.xlu0 %695
        %697 = vrot.lane.b32.xlu0 %v603, 120
        %v698 = vpop.permute.xlu0 %697
        %v699 = vsel %vm633, %v696, 0
        %v701 = vsel %vm633, %v698, 0
        %703 = vmatpush.xpose.msra.mxu0 0.0
        %704 = vmatpush.xpose.msra.mxu0 0.0
        %705 = vmatpush.xpose.msra.mxu0 0.0
        %706 = vmatpush.xpose.msra.mxu0 0.0
        %707 = vmatpush.xpose.msra.mxu0 0.0
        %708 = vmatpush.xpose.msra.mxu0 0.0
        %709 = vmatpush.xpose.msra.mxu0 0.0
        %710 = vmatpush.xpose.msra.mxu0 0.0
        %711 = vmatpush.xpose.msra.mxu0 0.0
        %712 = vmatpush.xpose.msra.mxu0 0.0
        %713 = vmatpush.xpose.msra.mxu0 0.0
        %714 = vmatpush.xpose.msra.mxu0 0.0
        %715 = vmatpush.xpose.msra.mxu0 0.0
        %716 = vmatpush.xpose.msra.mxu0 0.0
        %717 = vmatpush.xpose.msra.mxu0 0.0
        %718 = vmatpush.xpose.msra.mxu0 %v701
        %719 = vmatmul.f32.gmra.mxu0 %v699
        %v720 = vpop.f32.mrf.mxu0
        %v721 = vadd.f32 %v552, %v720
        %722 = vdwg.mxu0
        %v723 = vmul.f32 %v721, 0.17677669
        %v724 = vsel %vm633, %v723, -inf
        %725 = vmax.xlane.f32.xlu0 %v724
        %v726 = vpop.xlane.xlu0 %725
        %v727 = vsub.f32 %v723, %v726
        %v728 = vmul.f32 %v727, 1.442695
        %v729 = vpow.pop %v728
        %v730 = vsel %vm633, %v729, 0.0
        %731 = vadd.xlane.f32.xlu0 %v730
        %v732 = vpop.xlane.xlu0 %731
        %v733 = vrcp.pop %v732
        %v734 = vmul.f32 %v729, %v733
        %736 = vrot.lane.b32.xlu0 %v627, 120
        %v737 = vpop.permute.xlu0 %736
        %v740 = vsel %vm633, %v734, 0
        %742 = vmatpush.msra.mxu0 0.0
        %743 = vmatpush.msra.mxu0 0.0
        %744 = vmatpush.msra.mxu0 0.0
        %745 = vmatpush.msra.mxu0 0.0
        %746 = vmatpush.msra.mxu0 0.0
        %747 = vmatpush.msra.mxu0 0.0
        %748 = vmatpush.msra.mxu0 0.0
        %749 = vmatpush.msra.mxu0 0.0
        %750 = vmatpush.msra.mxu0 0.0
        %751 = vmatpush.msra.mxu0 0.0
        %752 = vmatpush.msra.mxu0 0.0
        %753 = vmatpush.msra.mxu0 0.0
        %754 = vmatpush.msra.mxu0 0.0
        %755 = vmatpush.msra.mxu0 0.0
        %756 = vmatpush.msra.mxu0 0.0
        %757 = vmatpush.msra.mxu0 %v737
        %758 = vmatmul.f32.gmra.mxu0 %v740
        %v759 = vpop.f32.mrf.mxu0
        %v760 = vadd.f32 0.0, %v759
        %761 = vdwg.mxu0
        %v763 = vsel %vm633, %v760, 0
        %765 = vmatpush.msra.mxu0 0.0
        %766 = vmatpush.msra.mxu0 0.0
        %767 = vmatpush.msra.mxu0 0.0
        %768 = vmatpush.msra.mxu0 0.0
        %769 = vmatpush.msra.mxu0 0.0
        %770 = vmatpush.msra.mxu0 0.0
        %771 = vmatpush.msra.mxu0 0.0
        %772 = vmatpush.msra.mxu0 0.0
        %773 = vmatpush.msra.mxu0 0.0
        %774 = vmatpush.msra.mxu0 0.0
        %775 = vmatpush.msra.mxu0 0.0
        %776 = vmatpush.msra.mxu0 0.0
        %777 = vmatpush.msra.mxu0 0.0
        %778 = vmatpush.msra.mxu0 0.0
        %779 = vmatpush.msra.mxu0 0.0
        %780 = vmatpush.msra.mxu0 %v630
        %781 = vmatmul.f32.gmra.mxu0 %v763
        %v782 = vpop.f32.mrf.mxu0
        %v783 = vadd.f32 0.0, %v782
        %784 = vdwg.mxu0
        %v786 = vsel %vm633, %v693, 0
        %788 = vmatpush.msra.mxu0 0.0
        %789 = vmatpush.msra.mxu0 0.0
        %790 = vmatpush.msra.mxu0 0.0
        %791 = vmatpush.msra.mxu0 0.0
        %792 = vmatpush.msra.mxu0 0.0
        %793 = vmatpush.msra.mxu0 0.0
        %794 = vmatpush.msra.mxu0 0.0
        %795 = vmatpush.msra.mxu0 0.0
        %796 = vmatpush.msra.mxu0 0.0
        %797 = vmatpush.msra.mxu0 0.0
        %798 = vmatpush.msra.mxu0 0.0
        %799 = vmatpush.msra.mxu0 0.0
        %800 = vmatpush.msra.mxu0 0.0
        %801 = vmatpush.msra.mxu0 0.0
        %802 = vmatpush.msra.mxu0 0.0
        %803 = vmatpush.msra.mxu0 %v629
        %804 = vmatmul.f32.gmra.mxu0 %v786
        %v805 = vpop.f32.mrf.mxu0
        %v806 = vadd.f32 %v783, %v805
        %807 = vdwg.mxu0
        %808 = vrot.lane.b32.xlu0 %v579, 112
        %v809 = vpop.permute.xlu0 %808
        %810 = vrot.lane.b32.xlu0 %v603, 112
        %v811 = vpop.permute.xlu0 %810
        %v812 = vsel %vm633, %v809, 0
        %v814 = vsel %vm633, %v811, 0
        %816 = vmatpush.xpose.msra.mxu0 0.0
        %817 = vmatpush.xpose.msra.mxu0 0.0
        %818 = vmatpush.xpose.msra.mxu0 0.0
        %819 = vmatpush.xpose.msra.mxu0 0.0
        %820 = vmatpush.xpose.msra.mxu0 0.0
        %821 = vmatpush.xpose.msra.mxu0 0.0
        %822 = vmatpush.xpose.msra.mxu0 0.0
        %823 = vmatpush.xpose.msra.mxu0 0.0
        %824 = vmatpush.xpose.msra.mxu0 0.0
        %825 = vmatpush.xpose.msra.mxu0 0.0
        %826 = vmatpush.xpose.msra.mxu0 0.0
        %827 = vmatpush.xpose.msra.mxu0 0.0
        %828 = vmatpush.xpose.msra.mxu0 0.0
        %829 = vmatpush.xpose.msra.mxu0 0.0
        %830 = vmatpush.xpose.msra.mxu0 0.0
        %831 = vmatpush.xpose.msra.mxu0 %v814
        %832 = vmatmul.f32.gmra.mxu0 %v812
        %v833 = vpop.f32.mrf.mxu0
        %v834 = vadd.f32 %v552, %v833
        %835 = vdwg.mxu0
        %v836 = vmul.f32 %v834, 0.17677669
        %v837 = vsel %vm633, %v836, -inf
        %838 = vmax.xlane.f32.xlu0 %v837
        %v839 = vpop.xlane.xlu0 %838
        %v840 = vsub.f32 %v836, %v839
        %v841 = vmul.f32 %v840, 1.442695
        %v842 = vpow.pop %v841
        %v843 = vsel %vm633, %v842, 0.0
        %844 = vadd.xlane.f32.xlu0 %v843
        %v845 = vpop.xlane.xlu0 %844
        %v846 = vrcp.pop %v845
        %v847 = vmul.f32 %v842, %v846
        %848 = vrot.lane.b32.xlu0 %v627, 112
        %v849 = vpop.permute.xlu0 %848
        %v852 = vsel %vm633, %v847, 0
        %854 = vmatpush.msra.mxu0 0.0
        %855 = vmatpush.msra.mxu0 0.0
        %856 = vmatpush.msra.mxu0 0.0
        %857 = vmatpush.msra.mxu0 0.0
        %858 = vmatpush.msra.mxu0 0.0
        %859 = vmatpush.msra.mxu0 0.0
        %860 = vmatpush.msra.mxu0 0.0
        %861 = vmatpush.msra.mxu0 0.0
        %862 = vmatpush.msra.mxu0 0.0
        %863 = vmatpush.msra.mxu0 0.0
        %864 = vmatpush.msra.mxu0 0.0
        %865 = vmatpush.msra.mxu0 0.0
        %866 = vmatpush.msra.mxu0 0.0
        %867 = vmatpush.msra.mxu0 0.0
        %868 = vmatpush.msra.mxu0 0.0
        %869 = vmatpush.msra.mxu0 %v849
        %870 = vmatmul.f32.gmra.mxu0 %v852
        %v871 = vpop.f32.mrf.mxu0
        %v872 = vadd.f32 0.0, %v871
        %873 = vdwg.mxu0
        %v875 = vsel %vm633, %v872, 0
        %877 = vmatpush.msra.mxu0 0.0
        %878 = vmatpush.msra.mxu0 0.0
        %879 = vmatpush.msra.mxu0 0.0
        %880 = vmatpush.msra.mxu0 0.0
        %881 = vmatpush.msra.mxu0 0.0
        %882 = vmatpush.msra.mxu0 0.0
        %883 = vmatpush.msra.mxu0 0.0
        %884 = vmatpush.msra.mxu0 0.0
        %885 = vmatpush.msra.mxu0 0.0
        %886 = vmatpush.msra.mxu0 0.0
        %887 = vmatpush.msra.mxu0 0.0
        %888 = vmatpush.msra.mxu0 0.0
        %889 = vmatpush.msra.mxu0 0.0
        %890 = vmatpush.msra.mxu0 0.0
        %891 = vmatpush.msra.mxu0 0.0
        %892 = vmatpush.msra.mxu0 %v631
        %893 = vmatmul.f32.gmra.mxu0 %v875
        %v894 = vpop.f32.mrf.mxu0
        %v895 = vadd.f32 0.0, %v894
        %896 = vdwg.mxu0
        %v897 = vadd.f32 %v806, %v895
        %898 = vrot.lane.b32.xlu0 %v579, 104
        %v899 = vpop.permute.xlu0 %898
        %900 = vrot.lane.b32.xlu0 %v603, 104
        %v901 = vpop.permute.xlu0 %900
        %v902 = vsel %vm633, %v899, 0
        %v904 = vsel %vm633, %v901, 0
        %906 = vmatpush.xpose.msra.mxu0 0.0
        %907 = vmatpush.xpose.msra.mxu0 0.0
        %908 = vmatpush.xpose.msra.mxu0 0.0
        %909 = vmatpush.xpose.msra.mxu0 0.0
        %910 = vmatpush.xpose.msra.mxu0 0.0
        %911 = vmatpush.xpose.msra.mxu0 0.0
        %912 = vmatpush.xpose.msra.mxu0 0.0
        %913 = vmatpush.xpose.msra.mxu0 0.0
        %914 = vmatpush.xpose.msra.mxu0 0.0
        %915 = vmatpush.xpose.msra.mxu0 0.0
        %916 = vmatpush.xpose.msra.mxu0 0.0
        %917 = vmatpush.xpose.msra.mxu0 0.0
        %918 = vmatpush.xpose.msra.mxu0 0.0
        %919 = vmatpush.xpose.msra.mxu0 0.0
        %920 = vmatpush.xpose.msra.mxu0 0.0
        %921 = vmatpush.xpose.msra.mxu0 %v904
        %922 = vmatmul.f32.gmra.mxu0 %v902
        %v923 = vpop.f32.mrf.mxu0
        %v924 = vadd.f32 %v552, %v923
        %925 = vdwg.mxu0
        %v926 = vmul.f32 %v924, 0.17677669
        %v927 = vsel %vm633, %v926, -inf
        %928 = vmax.xlane.f32.xlu0 %v927
        %v929 = vpop.xlane.xlu0 %928
        %v930 = vsub.f32 %v926, %v929
        %v931 = vmul.f32 %v930, 1.442695
        %v932 = vpow.pop %v931
        %v933 = vsel %vm633, %v932, 0.0
        %934 = vadd.xlane.f32.xlu0 %v933
        %v935 = vpop.xlane.xlu0 %934
        %v936 = vrcp.pop %v935
        %v937 = vmul.f32 %v932, %v936
        %938 = vrot.lane.b32.xlu0 %v627, 104
        %v939 = vpop.permute.xlu0 %938
        %v942 = vsel %vm633, %v937, 0
        %944 = vmatpush.msra.mxu0 0.0
        %945 = vmatpush.msra.mxu0 0.0
        %946 = vmatpush.msra.mxu0 0.0
        %947 = vmatpush.msra.mxu0 0.0
        %948 = vmatpush.msra.mxu0 0.0
        %949 = vmatpush.msra.mxu0 0.0
        %950 = vmatpush.msra.mxu0 0.0
        %951 = vmatpush.msra.mxu0 0.0
        %952 = vmatpush.msra.mxu0 0.0
        %953 = vmatpush.msra.mxu0 0.0
        %954 = vmatpush.msra.mxu0 0.0
        %955 = vmatpush.msra.mxu0 0.0
        %956 = vmatpush.msra.mxu0 0.0
        %957 = vmatpush.msra.mxu0 0.0
        %958 = vmatpush.msra.mxu0 0.0
        %959 = vmatpush.msra.mxu0 %v939
        %960 = vmatmul.f32.gmra.mxu0 %v942
        %v961 = vpop.f32.mrf.mxu0
        %v962 = vadd.f32 0.0, %v961
        %963 = vdwg.mxu0
        %v965 = vsel %vm633, %v962, 0
        %967 = vmatpush.msra.mxu0 0.0
        %968 = vmatpush.msra.mxu0 0.0
        %969 = vmatpush.msra.mxu0 0.0
        %970 = vmatpush.msra.mxu0 0.0
        %971 = vmatpush.msra.mxu0 0.0
        %972 = vmatpush.msra.mxu0 0.0
        %973 = vmatpush.msra.mxu0 0.0
        %974 = vmatpush.msra.mxu0 0.0
        %975 = vmatpush.msra.mxu0 0.0
        %976 = vmatpush.msra.mxu0 0.0
        %977 = vmatpush.msra.mxu0 0.0
        %978 = vmatpush.msra.mxu0 0.0
        %979 = vmatpush.msra.mxu0 0.0
        %980 = vmatpush.msra.mxu0 0.0
        %981 = vmatpush.msra.mxu0 0.0
        %982 = vmatpush.msra.mxu0 %v632
        %983 = vmatmul.f32.gmra.mxu0 %v965
        %v984 = vpop.f32.mrf.mxu0
        %v985 = vadd.f32 0.0, %v984
        %986 = vdwg.mxu0
        %v987 = vadd.f32 %v897, %v985
        %v988 = vld [vmem:[%s6] sm:$0x1]
        %v990 = vperm.slane %v988, 0
        %v992 = vadd.f32 %v987, %v990
        %v993 = vadd.f32 %v992, %v551
        %v994 = vsel %vm557, %v993, 0.0
        %995 = vadd.xlane.f32.xlu0 %v994
        %v996 = vpop.xlane.xlu0 %995
        %v997 = vrcp.pop 32.0
        %v998 = vmul.f32 32.0, %v997
        %v999 = vsub.f32 1.0, %v998
        %v1000 = vmul.f32 %v997, %v999
        %v1001 = vadd.f32 %v997, %v1000
        %vm1002 = vweird.f32 %v997
        %v1003 = vsel %vm1002, %v997, %v1001
        %v1004 = vmul.f32 %v996, %v1003
        %v1005 = vsub.f32 %v993, %v1004
        %v1006 = vmul.f32 %v1005, %v1005
        %v1007 = vsel %vm557, %v1006, 0.0
        %1008 = vadd.xlane.f32.xlu0 %v1007
        %v1009 = vpop.xlane.xlu0 %1008
        %v1010 = vmul.f32 %v1009, %v1003
        %v1011 = vadd.f32 %v1010, 1e-05
        %v1012 = vrsqrt.pop %v1011
        %v1013 = vmul.f32 %v1012, %v1011
        %v1014 = vmul.f32 %v1013, %v1012
        %v1015 = vmul.f32 0.5, %v1014
        %v1016 = vsub.f32 1.5, %v1015
        %v1017 = vmul.f32 %v1012, %v1016
        %vm1018 = vweird.f32 %v1011
        %vm1019 = vweird.f32 %v1012
        %vm1020 = vmor %vm1018, %vm1019
        %v1021 = vsel %vm1020, %v1012, %v1017
        %v1022 = vmul.f32 %v1005, %v1021
        %v1023 = vld [vmem:[%s7] sm:$0x1]
        %v1025 = vperm.slane %v1023, 0
        %v1027 = vmul.f32 %v1022, %v1025
        %v1028 = vld [vmem:[%s8] sm:$0x1]
        %v1030 = vperm.slane %v1028, 0
        %v1032 = vadd.f32 %v1027, %v1030
        %v1033 = vld [vmem:[%s9] sm:$0xff]
        %v1034 = vld [vmem:[%s9 + $0x8] sm:$0xff]
        %v1035 = vld [vmem:[%s9 + $0x10] sm:$0xff]
        %v1036 = vld [vmem:[%s9 + $0x18] sm:$0xff]
        %v1037 = vld [vmem:[%s10] sm:$0x1]
        %v1039 = vperm.slane %v1037, 0
        %v1042 = vsel %vm557, %v1032, 0
        %1044 = vmatpush.msra.mxu0 0.0
        %1045 = vmatpush.msra.mxu0 0.0
        %1046 = vmatpush.msra.mxu0 0.0
        %1047 = vmatpush.msra.mxu0 0.0
        %1048 = vmatpush.msra.mxu0 0.0
        %1049 = vmatpush.msra.mxu0 0.0
        %1050 = vmatpush.msra.mxu0 0.0
        %1051 = vmatpush.msra.mxu0 0.0
        %1052 = vmatpush.msra.mxu0 0.0
        %1053 = vmatpush.msra.mxu0 0.0
        %1054 = vmatpush.msra.mxu0 0.0
        %1055 = vmatpush.msra.mxu0 0.0
        %1056 = vmatpush.msra.mxu0 %v1036
        %1057 = vmatpush.msra.mxu0 %v1035
        %1058 = vmatpush.msra.mxu0 %v1034
        %1059 = vmatpush.msra.mxu0 %v1033
        %1060 = vmatmul.f32.gmra.mxu0 %v1042
        %v1061 = vpop.f32.mrf.mxu0
        %v1062 = vadd.f32 %v1039, %v1061
        %1063 = vdwg.mxu0
        %v1064 = vmax.f32 %v1062, 0.0
        %v1065 = vld [vmem:[%s11] sm:$0xff]
        %v1066 = vld [vmem:[%s11 + $0x8] sm:$0xff]
        %v1067 = vld [vmem:[%s11 + $0x10] sm:$0xff]
        %v1068 = vld [vmem:[%s11 + $0x18] sm:$0xff]
        %v1069 = vld [vmem:[%s11 + $0x20] sm:$0xff]
        %v1070 = vld [vmem:[%s11 + $0x28] sm:$0xff]
        %v1071 = vld [vmem:[%s11 + $0x30] sm:$0xff]
        %v1072 = vld [vmem:[%s11 + $0x38] sm:$0xff]
        %v1073 = vld [vmem:[%s11 + $0x40] sm:$0xff]
        %v1074 = vld [vmem:[%s11 + $0x48] sm:$0xff]
        %v1075 = vld [vmem:[%s11 + $0x50] sm:$0xff]
        %v1076 = vld [vmem:[%s11 + $0x58] sm:$0xff]
        %v1077 = vld [vmem:[%s11 + $0x60] sm:$0xff]
        %v1078 = vld [vmem:[%s11 + $0x68] sm:$0xff]
        %v1079 = vld [vmem:[%s11 + $0x70] sm:$0xff]
        %v1080 = vld [vmem:[%s11 + $0x78] sm:$0xff]
        %v1081 = vld [vmem:[%s12] sm:$0x1]
        %v1083 = vperm.slane %v1081, 0
        %1085 = vmatpush.msra.mxu0 %v1080
        %1086 = vmatpush.msra.mxu0 %v1079
        %1087 = vmatpush.msra.mxu0 %v1078
        %1088 = vmatpush.msra.mxu0 %v1077
        %1089 = vmatpush.msra.mxu0 %v1076
        %1090 = vmatpush.msra.mxu0 %v1075
        %1091 = vmatpush.msra.mxu0 %v1074
        %1092 = vmatpush.msra.mxu0 %v1073
        %1093 = vmatpush.msra.mxu0 %v1072
        %1094 = vmatpush.msra.mxu0 %v1071
        %1095 = vmatpush.msra.mxu0 %v1070
        %1096 = vmatpush.msra.mxu0 %v1069
        %1097 = vmatpush.msra.mxu0 %v1068
        %1098 = vmatpush.msra.mxu0 %v1067
        %1099 = vmatpush.msra.mxu0 %v1066
        %1100 = vmatpush.msra.mxu0 %v1065
        %1101 = vmatmul.f32.gmra.mxu0 %v1064
        %v1102 = vpop.f32.mrf.mxu0
        %v1103 = vadd.f32 %v1083, %v1102
        %1104 = vdwg.mxu0
        %v1105 = vadd.f32 %v1103, %v1032
        %v1106 = vsel %vm557, %v1105, 0.0
        %1107 = vadd.xlane.f32.xlu0 %v1106
        %v1108 = vpop.xlane.xlu0 %1107
        %v1109 = vmul.f32 %v1108, %v1003
        %v1110 = vsub.f32 %v1105, %v1109
        %v1111 = vmul.f32 %v1110, %v1110
        %v1112 = vsel %vm557, %v1111, 0.0
        %1113 = vadd.xlane.f32.xlu0 %v1112
        %v1114 = vpop.xlane.xlu0 %1113
        %v1115 = vmul.f32 %v1114, %v1003
        %v1116 = vadd.f32 %v1115, 1e-05
        %v1117 = vrsqrt.pop %v1116
        %v1118 = vmul.f32 %v1117, %v1116
        %v1119 = vmul.f32 %v1118, %v1117
        %v1120 = vmul.f32 0.5, %v1119
        %v1121 = vsub.f32 1.5, %v1120
        %v1122 = vmul.f32 %v1117, %v1121
        %vm1123 = vweird.f32 %v1116
        %vm1124 = vweird.f32 %v1117
        %vm1125 = vmor %vm1123, %vm1124
        %v1126 = vsel %vm1125, %v1117, %v1122
        %v1127 = vmul.f32 %v1110, %v1126
        %v1128 = vld [vmem:[%s13] sm:$0x1]
        %v1130 = vperm.slane %v1128, 0
        %v1132 = vmul.f32 %v1127, %v1130
        %v1133 = vld [vmem:[%s14] sm:$0x1]
        %v1135 = vperm.slane %v1133, 0
        %v1137 = vadd.f32 %v1132, %v1135
        %1138 = vst.msk [vmem:[%s550] sm:$0xff] %vm557, %v1137
        %s1139 = sand.u32 %s368, 1
        %s1140 = scalar_lea.sflag [#allocation4], %s1139
        %s1141 = sand.u32 %s368, 1
        %s1142 = smul.addr %s1141, 8
        %s1143 = scalar_lea.vmem [#allocation7], %s1142
        // Predicated region
        $region89: #{tpu_custom_call.1} parent=79 // pred_check
          %p1144 = pneg %p378
        $region90: #{tpu_custom_call.1} parent=79 // pred_check_branch
          %1146 = sbr.rel (%p1144) target = $region92
        $region91: #{tpu_custom_call.1} parent=79 // pred_region
          %1148 = vsyncadd %s1140, 0
          %s1149 = smul.addr %s35, 8
          %s1150 = scalar_lea.hbm %s15, %s1149
          %s1152 = sshll.u32 %s1143, 4
          %s1153 = int_to_ptr.vmem [resolvable:$true] %s1152
          %s1154 = sshll.u32 %s1150, 4
          %s1155 = int_to_ptr.hbm [resolvable:$true] %s1154
          %1157 = dma.vmem_to_hbm [thread:$0]  %s1153, 128, %s1155, %s1140
        $region92: #{tpu_custom_call.1} parent=79 // pred_fallthru
          _
      $region80: #{tpu_custom_call.1} parent=5 // pred_fallthru
        _
      %p1158 = scmp.le.s32.totalorder 2, %s30
      // Predicated region
      $region93: #{tpu_custom_call.1} parent=5 // pred_check
        %p1159 = pneg %p1158
      $region94: #{tpu_custom_call.1} parent=5 // pred_check_branch
        %1161 = sbr.rel (%p1159) target = $region96
      $region95: #{tpu_custom_call.1} parent=5 // pred_region
        %s1162 = ssub.s32 %s30, 2
        // Predicated region
        $region97: #{tpu_custom_call.1} parent=95 // pred_check
          %p1163 = pneg %p384
        $region98: #{tpu_custom_call.1} parent=95 // pred_check_branch
          %1165 = sbr.rel (%p1163) target = $region100
        $region99: #{tpu_custom_call.1} parent=95 // pred_region
          %s1166 = sand.u32 %s369, 1
          %s1167 = scalar_lea.sflag [#allocation4], %s1166
          %s1168 = sand.u32 %s369, 1
          %s1169 = smul.addr %s1168, 8
          %s1170 = scalar_lea.vmem [#allocation7], %s1169
          %1172 = dma.done %s1167, 128
        $region100: #{tpu_custom_call.1} parent=95 // pred_fallthru
          _
      $region96: #{tpu_custom_call.1} parent=5 // pred_fallthru
        _
    $region6: #{tpu_custom_call.1} parent=1 // loop_footer
      %s34 = sadd.s32 1, %s30
    $region7: #{tpu_custom_call.1} parent=1 // loop_footer_branch
      %29 = sbr.rel target = $region3
    $region8: #{tpu_custom_call.1} parent=1 // loop_exit
      _
    %1173 = vsyncpa [#allocation3], 1
    %s1174 = scalar_lea.sflag [#allocation3], 1
    %1175 = vsyncpa %s1174, 1
    %1176 = vsyncpa [#allocation6], 1
    %s1177 = scalar_lea.sflag [#allocation6], 1
    %1178 = vsyncpa %s1177, 1
    %1179 = vsyncpa [#allocation4], 1
    %s1180 = scalar_lea.sflag [#allocation4], 1
    %1181 = vsyncpa %s1180, 1

</llo_original>
